<compile_context>
chip_gen: v7x
topology: tpu7x:2x2x1
jax: 0.10.0
libtpu: 0.0.40
codegen_flags: <defaults>
</compile_context>

<pallas_src>
import functools

import jax
import jax.numpy as jnp
from jax.experimental import pallas as pl
from jax.experimental.pallas import tpu as pltpu

NOISE_FAC = 0.1  # synthetic value for afg['noise_fac'] (deterministic in-script config)


# --------------------------------------------------------------------------- helpers
def _bilinear_weights(offsets, sizes, in_size, out_size, dtype=jnp.bfloat16):
    """Per-cutout bilinear (align_corners=True) resampling matrices.

    offsets, sizes: (cutn,) crop origin / extent along this axis.
    Returns (cutn, out_size, in_size) so that W @ line resamples
    line[offset : offset + size] down to out_size samples.  `lo` is clamped to
    in_size - 2 so edge rows always sum to 1 and never index out of bounds.
    """
    offs = offsets.astype(jnp.float32)[:, None]                      # (cutn, 1)
    span = sizes.astype(jnp.float32)[:, None] - 1.0                  # (cutn, 1)
    if out_size > 1:
        pos = offs + jnp.arange(out_size, dtype=jnp.float32)[None, :] * (
            span / float(out_size - 1))
    else:
        pos = offs + 0.5 * span
    pos = jnp.clip(pos, 0.0, float(in_size - 1))
    lo = jnp.clip(jnp.floor(pos), 0.0, float(max(in_size - 2, 0)))
    frac = pos - lo                                                  # (cutn, out)
    cols = jnp.arange(in_size, dtype=jnp.float32)[None, None, :]     # (1, 1, in)
    w = ((cols == lo[..., None]) * (1.0 - frac)[..., None]
         + (cols == lo[..., None] + 1.0) * frac[..., None])
    return w.astype(dtype)                                           # (cutn, out, in)


def _sample_params(key, x_shape, cut_size, cutn, cut_pow, noise_fac):
    """Host-side randomness: crop params -> bf16 interp matrices, facs, bf16 noise."""
    B, C, H, W = x_shape
    S = cut_size
    Hp = -(-H // 8) * 8            # pad H so in-kernel row slices stay sublane-aligned
    k_size, k_ox, k_oy, k_fac, k_noise = jax.random.split(key, 5)

    max_size = min(W, H)
    min_size = min(W, H, S)
    r = jax.random.uniform(k_size, (cutn,), dtype=jnp.float32)
    sizes = jnp.floor(r ** cut_pow * (max_size - min_size) + min_size).astype(jnp.int32)
    ox = jnp.floor(jax.random.uniform(k_ox, (cutn,), dtype=jnp.float32)
                   * (W - sizes + 1).astype(jnp.float32)).astype(jnp.int32)
    oy = jnp.floor(jax.random.uniform(k_oy, (cutn,), dtype=jnp.float32)
                   * (H - sizes + 1).astype(jnp.float32)).astype(jnp.int32)

    wy = _bilinear_weights(oy, sizes, Hp, S)                               # (cutn, S, Hp)
    wxt = jnp.transpose(_bilinear_weights(ox, sizes, W, S), (0, 2, 1))     # (cutn, W, S)

    if noise_fac:
        # facs shape [cutn, 1, 1, 1] in torch; its broadcast implies batch == 1.
        facs = jax.random.uniform(k_fac, (cutn,), dtype=jnp.float32,
                                  minval=0.0, maxval=noise_fac)
        noise = jax.random.normal(k_noise, (cutn, B * C * S, S), dtype=jnp.bfloat16)
    else:
        facs = jnp.zeros((cutn,), jnp.float32)
        noise = None
    return wy, wxt, facs, noise


def _pick_group(cutn, cut_size):
    """Cutouts fused per grid step: target a 256-wide MXU N dim, but keep >= 2 grid
    steps so the "parallel" axis can still shard across v7x's two TensorCores."""
    divisors = [g for g in range(1, cutn + 1) if cutn % g == 0]
    allowed = [g for g in divisors if cutn // g >= 2] or [1]
    for g in allowed:
        if g * cut_size >= 256:
            return g
    return allowed[-1]


# --------------------------------------------------------------------------- kernel
def _cutouts_compute(facs_ref, x_ref, wy_ref, wxt_ref, noise_ref, o_ref,
                     *, bc, h, s, group):
    n = pl.program_id(0)

    # Stage 1: one wide MXU matmul resamples the crop's W axis for all `group`
    # cutouts at once: (bc*h, W) @ (W, group*S).  bf16 operands, f32 accumulation.
    xb = x_ref[...].astype(jnp.bfloat16)
    t1 = jnp.dot(xb, wxt_ref[...], preferred_element_type=jnp.float32)
    t1 = t1.astype(jnp.bfloat16)                                  # (bc*h, group*s)

    # Stage 2: per (cutout, image) row resampling, stored straight into o_ref
    # (no concatenate -> no extra VMEM copy, short live ranges).  bc/group are small
    # static constants, so the loops fully unroll into 2-D MXU dots.
    for g in range(group):
        wy_g = wy_ref[g]                                          # (s, h) bf16
        if noise_ref is not None:
            fac = facs_ref[n * group + g]                         # SMEM per-cutout factor
        for i in range(bc):
            # h % 8 == 0 (padded in the wrapper) -> sublane-aligned slices.
            blk = jnp.dot(wy_g, t1[i * h:(i + 1) * h, g * s:(g + 1) * s],
                          preferred_element_type=jnp.float32)     # (s, s)
            if noise_ref is not None:
                blk = blk + fac * noise_ref[g, i * s:(i + 1) * s, :].astype(jnp.float32)
            o_ref[g, i * s:(i + 1) * s, :] = blk.astype(o_ref.dtype)


def _cutouts_noise_kernel(facs_ref, x_ref, wy_ref, wxt_ref, noise_ref, o_ref,
                          *, bc, h, s, group):
    _cutouts_compute(facs_ref, x_ref, wy_ref, wxt_ref, noise_ref, o_ref,
                     bc=bc, h=h, s=s, group=group)


def _cutouts_plain_kernel(facs_ref, x_ref, wy_ref, wxt_ref, o_ref,
                          *, bc, h, s, group):
    _cutouts_compute(facs_ref, x_ref, wy_ref, wxt_ref, None, o_ref,
                     bc=bc, h=h, s=s, group=group)


# --------------------------------------------------------------------------- wrapper
def _vmem_limit(*, bchp, w, s, hp, group, bcs, itemsize, with_noise, single_buffer_x):
    x_bytes = itemsize * bchp * w * (1 if single_buffer_x else 2)   # shared image block
    dbl = 2                                                         # Pallas double-buffers
    wy_bytes = dbl * 2 * group * s * hp                             # bf16
    wxt_bytes = dbl * 2 * w * group * s                             # bf16
    noise_bytes = dbl * 2 * group * bcs * s if with_noise else 0    # bf16
    out_bytes = dbl * itemsize * group * bcs * s
    t1_bytes = (4 + 2) * bchp * group * s                           # f32 result + bf16 copy
    total = (x_bytes + wy_bytes + wxt_bytes + noise_bytes + out_bytes + t1_bytes
             + 2 * 1024 * 1024)                                     # compiler scratch headroom
    # Cap well below v7x's 64 MiB physical VMEM (48 MiB leaves headroom).
    return int(min(48 * 1024 * 1024, max(total, 8 * 1024 * 1024)))


def _build_call(kernel, *, steps, group, bcs, bchp, w, s, hp, cutn, out_dtype,
                with_noise, single_buffer_x):
    x_index = lambda n, facs_ref: (0, 0)
    if single_buffer_x:
        # x's block index never changes -> double-buffering buys nothing; keep one copy.
        x_spec = pl.BlockSpec((bchp, w), x_index, pipeline_mode=pl.Buffered(1))
    else:
        x_spec = pl.BlockSpec((bchp, w), x_index)

    in_specs = [
        x_spec,                                                               # x (shared)
        pl.BlockSpec((group, s, hp), lambda n, facs_ref: (n, 0, 0)),          # Wy[gG:(g+1)G]
        pl.BlockSpec((None, w, group * s), lambda n, facs_ref: (n, 0, 0)),    # stacked Wx^T
    ]
    if with_noise:
        in_specs.append(
            pl.BlockSpec((group, bcs, s), lambda n, facs_ref: (n, 0, 0)))     # bf16 noise

    itemsize = jnp.dtype(out_dtype).itemsize
    vmem_limit = _vmem_limit(bchp=bchp, w=w, s=s, hp=hp, group=group, bcs=bcs,
                             itemsize=itemsize, with_noise=with_noise,
                             single_buffer_x=single_buffer_x)

    return pl.pallas_call(
        kernel,
        out_shape=jax.ShapeDtypeStruct((cutn, bcs, s), out_dtype),
        grid_spec=pltpu.PrefetchScalarGridSpec(
            num_scalar_prefetch=1,                 # facs -> SMEM, read as facs_ref[idx]
            grid=(steps,),
            in_specs=in_specs,
            out_specs=pl.BlockSpec((group, bcs, s), lambda n, facs_ref: (n, 0, 0)),
        ),
        compiler_params=pltpu.CompilerParams(
            dimension_semantics=("parallel",),     # cutout groups independent (v7x 2-TC)
            vmem_limit_bytes=vmem_limit,
        ),
    )


def make_cutouts_nr_update(x, *, cut_size, cutn, cut_pow=1.0, noise_fac=NOISE_FAC, key=None):
    """x: NCHW float array (B, C, H, W). Returns (cutn*B, C, cut_size, cut_size).

    Note: the torch module's facs broadcast ([cutn,1,1,1]) is only well-defined for
    B == 1; for B > 1 the per-cutout factor is applied to all images of that cutout.
    """
    B, C, H, W = x.shape
    S = cut_size
    if key is None:
        key = jax.random.PRNGKey(0)

    wy, wxt, facs, noise = _sample_params(key, x.shape, S, cutn, cut_pow, noise_fac)
    with_noise = noise is not None
    Hp = wy.shape[-1]
    if Hp != H:
        x = jnp.pad(x, ((0, 0), (0, 0), (0, Hp - H), (0, 0)))
    x2d = x.reshape(B * C * Hp, W)             # pure reshape; no HBM transpose pass

    group = _pick_group(cutn, S)
    steps = cutn // group
    # Stack each step's `group` column-interp matrices side by side: (steps, W, group*S).
    wxt_g = (wxt.reshape(steps, group, W, S).transpose(0, 2, 1, 3)
                .reshape(steps, W, group * S))

    bc = B * C
    bcs = bc * S
    if with_noise:
        kernel = functools.partial(_cutouts_noise_kernel, bc=bc, h=Hp, s=S, group=group)
        operands = (facs, x2d, wy, wxt_g, noise)
    else:
        kernel = functools.partial(_cutouts_plain_kernel, bc=bc, h=Hp, s=S, group=group)
        operands = (facs, x2d, wy, wxt_g)

    def run(single_buffer_x):
        call = _build_call(kernel, steps=steps, group=group, bcs=bcs, bchp=bc * Hp,
                           w=W, s=S, hp=Hp, cutn=cutn, out_dtype=x.dtype,
                           with_noise=with_noise, single_buffer_x=single_buffer_x)
        return jax.block_until_ready(call(*operands))

    if hasattr(pl, "Buffered"):
        try:
            out = run(True)
        except Exception:          # conservative fallback if Buffered(1) is rejected
            out = run(False)
    else:
        out = run(False)

    # (cutn, B*C*S, S) -> (cutn*B, C, S, S) == torch.cat(cutouts, dim=0)
    return out.reshape(cutn, B, C, S, S).reshape(cutn * B, C, S, S)


def _reference(x, wy, wxt, facs, noise, cut_size):
    """Pure-JAX reference mirroring the kernel's bf16-operand / f32-accumulate math."""
    B, C, H, W = x.shape
    S = cut_size
    cutn = wy.shape[0]
    Hp = wy.shape[-1]
    if Hp != H:
        x = jnp.pad(x, ((0, 0), (0, 0), (0, Hp - H), (0, 0)))
    xb = x.astype(jnp.bfloat16)
    t1 = jnp.einsum('bchw,nws->nbchs', xb, wxt,
                    preferred_element_type=jnp.float32).astype(jnp.bfloat16)
    cut = jnp.einsum('nyh,nbchs->nbcys', wy, t1,
                     preferred_element_type=jnp.float32)             # (cutn, B, C, S, S)
    if noise is not None:
        cut = cut + (facs[:, None, None, None, None]
                     * noise.reshape(cutn, B, C, S, S).astype(jnp.float32))
    return cut.reshape(cutn * B, C, S, S).astype(x.dtype)


if __name__ == "__main__":
    # The torch module's facs broadcast ([cutn,1,1,1] onto [cutn*B,...]) implies B == 1.
    B, C, H, W = 1, 3, 32, 32
    cut_size, cutn, cut_pow = 16, 4, 1.0

    root = jax.random.PRNGKey(0)
    k_x, k_mod = jax.random.split(root)
    x = jax.random.normal(k_x, (B, C, H, W), dtype=jnp.float32)

    # Noisy path (noise_fac > 0), matching the reference config.
    out = make_cutouts_nr_update(x, cut_size=cut_size, cutn=cutn,
                                 cut_pow=cut_pow, noise_fac=NOISE_FAC, key=k_mod)
    out = jax.block_until_ready(out)

    wy, wxt, facs, noise = _sample_params(k_mod, x.shape, cut_size, cutn, cut_pow, NOISE_FAC)
    ref = _reference(x, wy, wxt, facs, noise, cut_size)

    assert out.shape == (cutn * B, C, cut_size, cut_size)
    assert bool(jnp.all(jnp.isfinite(out)))
    err = float(jnp.max(jnp.abs(out - ref)))
    assert err < 5e-3, err

    # No-noise variant (noise_fac == 0): no noise stream is allocated or DMA'd.
    out0 = make_cutouts_nr_update(x, cut_size=cut_size, cutn=cutn,
                                  cut_pow=cut_pow, noise_fac=0.0, key=k_mod)
    out0 = jax.block_until_ready(out0)
    ref0 = _reference(x, wy, wxt, facs, None, cut_size)
    err0 = float(jnp.max(jnp.abs(out0 - ref0)))
    assert err0 < 5e-3, err0

    print("KERNEL_OK")
</pallas_src>

<mosaic_0001>
module attributes {stable_mosaic.version = 11 : i64} {
  func.func @_cutouts_noise_kernel(%arg0: i32, %arg1: memref<4xf32, #tpu.memory_space<smem>>, %arg2: memref<96x32xf32, #tpu.memory_space<vmem>>, %arg3: memref<2x16x32xbf16, #tpu.memory_space<vmem>>, %arg4: memref<1x32x32xbf16, #tpu.memory_space<vmem>>, %arg5: memref<2x48x16xbf16, #tpu.memory_space<vmem>>, %arg6: memref<2x48x16xf32, #tpu.memory_space<vmem>>) attributes {dimension_semantics = [#tpu.dimension_semantics<parallel>], iteration_bounds = array<i64: 2>, scalar_prefetch = 1 : i64, scratch_operands = 0 : i64, tpu.core_type = #tpu.core_type<tc>, window_params = [{pipeline_mode = #tpu.pipeline_mode<synchronous>, transform_indices = @transform_0, window_bounds = array<i64: 96, 32>}, {transform_indices = @transform_1, window_bounds = array<i64: 2, 16, 32>}, {transform_indices = @transform_2, window_bounds = array<i64: 1, 32, 32>}, {transform_indices = @transform_3, window_bounds = array<i64: 2, 48, 16>}, {transform_indices = @transform_4, window_bounds = array<i64: 2, 48, 16>}]} {
    %c0 = arith.constant 0 : index
    %c0_0 = arith.constant 0 : index
    %0 = vector.load %arg2[%c0, %c0_0] : memref<96x32xf32, #tpu.memory_space<vmem>>, vector<96x32xf32>
    %1 = arith.truncf %0 : vector<96x32xf32> to vector<96x32xbf16>
    %c0_1 = arith.constant 0 : index
    %c0_2 = arith.constant 0 : index
    %c0_3 = arith.constant 0 : index
    %2 = vector.load %arg4[%c0_1, %c0_2, %c0_3] : memref<1x32x32xbf16, #tpu.memory_space<vmem>>, vector<1x32x32xbf16>
    %3 = vector.shape_cast %2 : vector<1x32x32xbf16> to vector<32x32xbf16>
    %cst = arith.constant dense<0.000000e+00> : vector<96x32xf32>
    %4 = tpu.matmul %1, %3, %cst {dimension_numbers = #tpu.dot_dimension_numbers<[1], [0], [0], [1], [0, 0, 1, 1], [], []>} : vector<96x32xbf16>, vector<32x32xbf16>, vector<96x32xf32> -> vector<96x32xf32>
    %5 = arith.truncf %4 : vector<96x32xf32> to vector<96x32xbf16>
    %c0_4 = arith.constant 0 : index
    %c0_5 = arith.constant 0 : index
    %c0_6 = arith.constant 0 : index
    %6 = vector.load %arg3[%c0_4, %c0_5, %c0_6] : memref<2x16x32xbf16, #tpu.memory_space<vmem>>, vector<1x16x32xbf16>
    %7 = vector.shape_cast %6 : vector<1x16x32xbf16> to vector<16x32xbf16>
    %c2_i32 = arith.constant 2 : i32
    %8 = arith.muli %arg0, %c2_i32 : i32
    %c0_i32 = arith.constant 0 : i32
    %9 = arith.addi %8, %c0_i32 : i32
    %10 = arith.index_cast %9 : i32 to index
    %11 = memref.load %arg1[%10] : memref<4xf32, #tpu.memory_space<smem>>
    %12 = vector.extract_strided_slice %5 {offsets = [0, 0], sizes = [32, 16], strides = [1, 1]} : vector<96x32xbf16> to vector<32x16xbf16>
    %cst_7 = arith.constant dense<0.000000e+00> : vector<16x16xf32>
    %13 = tpu.matmul %7, %12, %cst_7 {dimension_numbers = #tpu.dot_dimension_numbers<[1], [0], [0], [1], [0, 0, 1, 1], [], []>} : vector<16x32xbf16>, vector<32x16xbf16>, vector<16x16xf32> -> vector<16x16xf32>
    %c0_8 = arith.constant 0 : index
    %c0_9 = arith.constant 0 : index
    %c0_10 = arith.constant 0 : index
    %14 = vector.load %arg5[%c0_8, %c0_9, %c0_10] : memref<2x48x16xbf16, #tpu.memory_space<vmem>>, vector<1x16x16xbf16>
    %15 = vector.shape_cast %14 : vector<1x16x16xbf16> to vector<16x16xbf16>
    %16 = arith.extf %15 : vector<16x16xbf16> to vector<16x16xf32>
    %17 = vector.broadcast %11 : f32 to vector<16x16xf32>
    %18 = arith.mulf %17, %16 : vector<16x16xf32>
    %19 = arith.addf %13, %18 : vector<16x16xf32>
    %c0_11 = arith.constant 0 : index
    %c0_12 = arith.constant 0 : index
    %c0_13 = arith.constant 0 : index
    %20 = vector.load %arg6[%c0_11, %c0_12, %c0_13] : memref<2x48x16xf32, #tpu.memory_space<vmem>>, vector<1x16x16xf32>
    %21 = vector.shape_cast %20 : vector<1x16x16xf32> to vector<16x16xf32>
    %22 = vector.shape_cast %19 : vector<16x16xf32> to vector<1x16x16xf32>
    tpu.vector_store %arg6[%c0_11, %c0_12, %c0_13], %22 {strides = array<i32>} : memref<2x48x16xf32, #tpu.memory_space<vmem>>, vector<1x16x16xf32>,
    %23 = vector.extract_strided_slice %5 {offsets = [32, 0], sizes = [32, 16], strides = [1, 1]} : vector<96x32xbf16> to vector<32x16xbf16>
    %cst_14 = arith.constant dense<0.000000e+00> : vector<16x16xf32>
    %24 = tpu.matmul %7, %23, %cst_14 {dimension_numbers = #tpu.dot_dimension_numbers<[1], [0], [0], [1], [0, 0, 1, 1], [], []>} : vector<16x32xbf16>, vector<32x16xbf16>, vector<16x16xf32> -> vector<16x16xf32>
    %c0_15 = arith.constant 0 : index
    %c16 = arith.constant 16 : index
    %c0_16 = arith.constant 0 : index
    %25 = vector.load %arg5[%c0_15, %c16, %c0_16] : memref<2x48x16xbf16, #tpu.memory_space<vmem>>, vector<1x16x16xbf16>
    %26 = vector.shape_cast %25 : vector<1x16x16xbf16> to vector<16x16xbf16>
    %27 = arith.extf %26 : vector<16x16xbf16> to vector<16x16xf32>
    %28 = vector.broadcast %11 : f32 to vector<16x16xf32>
    %29 = arith.mulf %28, %27 : vector<16x16xf32>
    %30 = arith.addf %24, %29 : vector<16x16xf32>
    %c0_17 = arith.constant 0 : index
    %c16_18 = arith.constant 16 : index
    %c0_19 = arith.constant 0 : index
    %31 = vector.load %arg6[%c0_17, %c16_18, %c0_19] : memref<2x48x16xf32, #tpu.memory_space<vmem>>, vector<1x16x16xf32>
    %32 = vector.shape_cast %31 : vector<1x16x16xf32> to vector<16x16xf32>
    %33 = vector.shape_cast %30 : vector<16x16xf32> to vector<1x16x16xf32>
    tpu.vector_store %arg6[%c0_17, %c16_18, %c0_19], %33 {strides = array<i32>} : memref<2x48x16xf32, #tpu.memory_space<vmem>>, vector<1x16x16xf32>,
    %34 = vector.extract_strided_slice %5 {offsets = [64, 0], sizes = [32, 16], strides = [1, 1]} : vector<96x32xbf16> to vector<32x16xbf16>
    %cst_20 = arith.constant dense<0.000000e+00> : vector<16x16xf32>
    %35 = tpu.matmul %7, %34, %cst_20 {dimension_numbers = #tpu.dot_dimension_numbers<[1], [0], [0], [1], [0, 0, 1, 1], [], []>} : vector<16x32xbf16>, vector<32x16xbf16>, vector<16x16xf32> -> vector<16x16xf32>
    %c0_21 = arith.constant 0 : index
    %c32 = arith.constant 32 : index
    %c0_22 = arith.constant 0 : index
    %36 = vector.load %arg5[%c0_21, %c32, %c0_22] : memref<2x48x16xbf16, #tpu.memory_space<vmem>>, vector<1x16x16xbf16>
    %37 = vector.shape_cast %36 : vector<1x16x16xbf16> to vector<16x16xbf16>
    %38 = arith.extf %37 : vector<16x16xbf16> to vector<16x16xf32>
    %39 = vector.broadcast %11 : f32 to vector<16x16xf32>
    %40 = arith.mulf %39, %38 : vector<16x16xf32>
    %41 = arith.addf %35, %40 : vector<16x16xf32>
    %c0_23 = arith.constant 0 : index
    %c32_24 = arith.constant 32 : index
    %c0_25 = arith.constant 0 : index
    %42 = vector.load %arg6[%c0_23, %c32_24, %c0_25] : memref<2x48x16xf32, #tpu.memory_space<vmem>>, vector<1x16x16xf32>
    %43 = vector.shape_cast %42 : vector<1x16x16xf32> to vector<16x16xf32>
    %44 = vector.shape_cast %41 : vector<16x16xf32> to vector<1x16x16xf32>
    tpu.vector_store %arg6[%c0_23, %c32_24, %c0_25], %44 {strides = array<i32>} : memref<2x48x16xf32, #tpu.memory_space<vmem>>, vector<1x16x16xf32>,
    %c1 = arith.constant 1 : index
    %c0_26 = arith.constant 0 : index
    %c0_27 = arith.constant 0 : index
    %45 = vector.load %arg3[%c1, %c0_26, %c0_27] : memref<2x16x32xbf16, #tpu.memory_space<vmem>>, vector<1x16x32xbf16>
    %46 = vector.shape_cast %45 : vector<1x16x32xbf16> to vector<16x32xbf16>
    %c2_i32_28 = arith.constant 2 : i32
    %47 = arith.muli %arg0, %c2_i32_28 : i32
    %c1_i32 = arith.constant 1 : i32
    %48 = arith.addi %47, %c1_i32 : i32
    %49 = arith.index_cast %48 : i32 to index
    %50 = memref.load %arg1[%49] : memref<4xf32, #tpu.memory_space<smem>>
    %51 = vector.extract_strided_slice %5 {offsets = [0, 16], sizes = [32, 16], strides = [1, 1]} : vector<96x32xbf16> to vector<32x16xbf16>
    %cst_29 = arith.constant dense<0.000000e+00> : vector<16x16xf32>
    %52 = tpu.matmul %46, %51, %cst_29 {dimension_numbers = #tpu.dot_dimension_numbers<[1], [0], [0], [1], [0, 0, 1, 1], [], []>} : vector<16x32xbf16>, vector<32x16xbf16>, vector<16x16xf32> -> vector<16x16xf32>
    %c1_30 = arith.constant 1 : index
    %c0_31 = arith.constant 0 : index
    %c0_32 = arith.constant 0 : index
    %53 = vector.load %arg5[%c1_30, %c0_31, %c0_32] : memref<2x48x16xbf16, #tpu.memory_space<vmem>>, vector<1x16x16xbf16>
    %54 = vector.shape_cast %53 : vector<1x16x16xbf16> to vector<16x16xbf16>
    %55 = arith.extf %54 : vector<16x16xbf16> to vector<16x16xf32>
    %56 = vector.broadcast %50 : f32 to vector<16x16xf32>
    %57 = arith.mulf %56, %55 : vector<16x16xf32>
    %58 = arith.addf %52, %57 : vector<16x16xf32>
    %c1_33 = arith.constant 1 : index
    %c0_34 = arith.constant 0 : index
    %c0_35 = arith.constant 0 : index
    %59 = vector.load %arg6[%c1_33, %c0_34, %c0_35] : memref<2x48x16xf32, #tpu.memory_space<vmem>>, vector<1x16x16xf32>
    %60 = vector.shape_cast %59 : vector<1x16x16xf32> to vector<16x16xf32>
    %61 = vector.shape_cast %58 : vector<16x16xf32> to vector<1x16x16xf32>
    tpu.vector_store %arg6[%c1_33, %c0_34, %c0_35], %61 {strides = array<i32>} : memref<2x48x16xf32, #tpu.memory_space<vmem>>, vector<1x16x16xf32>,
    %62 = vector.extract_strided_slice %5 {offsets = [32, 16], sizes = [32, 16], strides = [1, 1]} : vector<96x32xbf16> to vector<32x16xbf16>
    %cst_36 = arith.constant dense<0.000000e+00> : vector<16x16xf32>
    %63 = tpu.matmul %46, %62, %cst_36 {dimension_numbers = #tpu.dot_dimension_numbers<[1], [0], [0], [1], [0, 0, 1, 1], [], []>} : vector<16x32xbf16>, vector<32x16xbf16>, vector<16x16xf32> -> vector<16x16xf32>
    %c1_37 = arith.constant 1 : index
    %c16_38 = arith.constant 16 : index
    %c0_39 = arith.constant 0 : index
    %64 = vector.load %arg5[%c1_37, %c16_38, %c0_39] : memref<2x48x16xbf16, #tpu.memory_space<vmem>>, vector<1x16x16xbf16>
    %65 = vector.shape_cast %64 : vector<1x16x16xbf16> to vector<16x16xbf16>
    %66 = arith.extf %65 : vector<16x16xbf16> to vector<16x16xf32>
    %67 = vector.broadcast %50 : f32 to vector<16x16xf32>
    %68 = arith.mulf %67, %66 : vector<16x16xf32>
    %69 = arith.addf %63, %68 : vector<16x16xf32>
    %c1_40 = arith.constant 1 : index
    %c16_41 = arith.constant 16 : index
    %c0_42 = arith.constant 0 : index
    %70 = vector.load %arg6[%c1_40, %c16_41, %c0_42] : memref<2x48x16xf32, #tpu.memory_space<vmem>>, vector<1x16x16xf32>
    %71 = vector.shape_cast %70 : vector<1x16x16xf32> to vector<16x16xf32>
    %72 = vector.shape_cast %69 : vector<16x16xf32> to vector<1x16x16xf32>
    tpu.vector_store %arg6[%c1_40, %c16_41, %c0_42], %72 {strides = array<i32>} : memref<2x48x16xf32, #tpu.memory_space<vmem>>, vector<1x16x16xf32>,
    %73 = vector.extract_strided_slice %5 {offsets = [64, 16], sizes = [32, 16], strides = [1, 1]} : vector<96x32xbf16> to vector<32x16xbf16>
    %cst_43 = arith.constant dense<0.000000e+00> : vector<16x16xf32>
    %74 = tpu.matmul %46, %73, %cst_43 {dimension_numbers = #tpu.dot_dimension_numbers<[1], [0], [0], [1], [0, 0, 1, 1], [], []>} : vector<16x32xbf16>, vector<32x16xbf16>, vector<16x16xf32> -> vector<16x16xf32>
    %c1_44 = arith.constant 1 : index
    %c32_45 = arith.constant 32 : index
    %c0_46 = arith.constant 0 : index
    %75 = vector.load %arg5[%c1_44, %c32_45, %c0_46] : memref<2x48x16xbf16, #tpu.memory_space<vmem>>, vector<1x16x16xbf16>
    %76 = vector.shape_cast %75 : vector<1x16x16xbf16> to vector<16x16xbf16>
    %77 = arith.extf %76 : vector<16x16xbf16> to vector<16x16xf32>
    %78 = vector.broadcast %50 : f32 to vector<16x16xf32>
    %79 = arith.mulf %78, %77 : vector<16x16xf32>
    %80 = arith.addf %74, %79 : vector<16x16xf32>
    %c1_47 = arith.constant 1 : index
    %c32_48 = arith.constant 32 : index
    %c0_49 = arith.constant 0 : index
    %81 = vector.load %arg6[%c1_47, %c32_48, %c0_49] : memref<2x48x16xf32, #tpu.memory_space<vmem>>, vector<1x16x16xf32>
    %82 = vector.shape_cast %81 : vector<1x16x16xf32> to vector<16x16xf32>
    %83 = vector.shape_cast %80 : vector<16x16xf32> to vector<1x16x16xf32>
    tpu.vector_store %arg6[%c1_47, %c32_48, %c0_49], %83 {strides = array<i32>} : memref<2x48x16xf32, #tpu.memory_space<vmem>>, vector<1x16x16xf32>,
    return
  }
  func.func @transform_0(%arg0: i32, %arg1: memref<4xf32, #tpu.memory_space<smem>>) -> (i32, i32) {
    %c0_i32 = arith.constant 0 : i32
    %c0_i32_0 = arith.constant 0 : i32
    %c0_i32_1 = arith.constant 0 : i32
    return %c0_i32, %c0_i32_0 : i32, i32
  }
  func.func @transform_1(%arg0: i32, %arg1: memref<4xf32, #tpu.memory_space<smem>>) -> (i32, i32, i32) {
    %c0_i32 = arith.constant 0 : i32
    %c0_i32_0 = arith.constant 0 : i32
    %c0_i32_1 = arith.constant 0 : i32
    return %arg0, %c0_i32, %c0_i32_0 : i32, i32, i32
  }
  func.func @transform_2(%arg0: i32, %arg1: memref<4xf32, #tpu.memory_space<smem>>) -> (i32, i32, i32) {
    %c0_i32 = arith.constant 0 : i32
    %c0_i32_0 = arith.constant 0 : i32
    %c0_i32_1 = arith.constant 0 : i32
    return %arg0, %c0_i32, %c0_i32_0 : i32, i32, i32
  }
  func.func @transform_3(%arg0: i32, %arg1: memref<4xf32, #tpu.memory_space<smem>>) -> (i32, i32, i32) {
    %c0_i32 = arith.constant 0 : i32
    %c0_i32_0 = arith.constant 0 : i32
    %c0_i32_1 = arith.constant 0 : i32
    return %arg0, %c0_i32, %c0_i32_0 : i32, i32, i32
  }
  func.func @transform_4(%arg0: i32, %arg1: memref<4xf32, #tpu.memory_space<smem>>) -> (i32, i32, i32) {
    %c0_i32 = arith.constant 0 : i32
    %c0_i32_0 = arith.constant 0 : i32
    %c0_i32_1 = arith.constant 0 : i32
    return %arg0, %c0_i32, %c0_i32_0 : i32, i32, i32
  }
}

module attributes {stable_mosaic.version = 11 : i64} {
  func.func @_cutouts_noise_kernel(%arg0: i32, %arg1: memref<4xf32, #tpu.memory_space<smem>>, %arg2: memref<96x32xf32, #tpu.memory_space<vmem>>, %arg3: memref<2x16x32xbf16, #tpu.memory_space<vmem>>, %arg4: memref<1x32x32xbf16, #tpu.memory_space<vmem>>, %arg5: memref<2x48x16xbf16, #tpu.memory_space<vmem>>, %arg6: memref<2x48x16xf32, #tpu.memory_space<vmem>>) attributes {dimension_semantics = [#tpu.dimension_semantics<parallel>], iteration_bounds = array<i64: 2>, scalar_prefetch = 1 : i64, scratch_operands = 0 : i64, tpu.core_type = #tpu.core_type<tc>, window_params = [{pipeline_mode = #tpu.pipeline_mode<synchronous>, transform_indices = @transform_0, window_bounds = array<i64: 96, 32>}, {transform_indices = @transform_1, window_bounds = array<i64: 2, 16, 32>}, {transform_indices = @transform_2, window_bounds = array<i64: 1, 32, 32>}, {transform_indices = @transform_3, window_bounds = array<i64: 2, 48, 16>}, {transform_indices = @transform_4, window_bounds = array<i64: 2, 48, 16>}]} {
    %c0 = arith.constant 0 : index
    %c0_0 = arith.constant 0 : index
    %0 = vector.load %arg2[%c0, %c0_0] : memref<96x32xf32, #tpu.memory_space<vmem>>, vector<96x32xf32>
    %1 = arith.truncf %0 : vector<96x32xf32> to vector<96x32xbf16>
    %c0_1 = arith.constant 0 : index
    %c0_2 = arith.constant 0 : index
    %c0_3 = arith.constant 0 : index
    %2 = vector.load %arg4[%c0_1, %c0_2, %c0_3] : memref<1x32x32xbf16, #tpu.memory_space<vmem>>, vector<1x32x32xbf16>
    %3 = vector.shape_cast %2 : vector<1x32x32xbf16> to vector<32x32xbf16>
    %cst = arith.constant dense<0.000000e+00> : vector<96x32xf32>
    %4 = tpu.matmul %1, %3, %cst {dimension_numbers = #tpu.dot_dimension_numbers<[1], [0], [0], [1], [0, 0, 1, 1], [], []>} : vector<96x32xbf16>, vector<32x32xbf16>, vector<96x32xf32> -> vector<96x32xf32>
    %5 = arith.truncf %4 : vector<96x32xf32> to vector<96x32xbf16>
    %c0_4 = arith.constant 0 : index
    %c0_5 = arith.constant 0 : index
    %c0_6 = arith.constant 0 : index
    %6 = vector.load %arg3[%c0_4, %c0_5, %c0_6] : memref<2x16x32xbf16, #tpu.memory_space<vmem>>, vector<1x16x32xbf16>
    %7 = vector.shape_cast %6 : vector<1x16x32xbf16> to vector<16x32xbf16>
    %c2_i32 = arith.constant 2 : i32
    %8 = arith.muli %arg0, %c2_i32 : i32
    %c0_i32 = arith.constant 0 : i32
    %9 = arith.addi %8, %c0_i32 : i32
    %10 = arith.index_cast %9 : i32 to index
    %11 = memref.load %arg1[%10] : memref<4xf32, #tpu.memory_space<smem>>
    %12 = vector.extract_strided_slice %5 {offsets = [0, 0], sizes = [32, 16], strides = [1, 1]} : vector<96x32xbf16> to vector<32x16xbf16>
    %cst_7 = arith.constant dense<0.000000e+00> : vector<16x16xf32>
    %13 = tpu.matmul %7, %12, %cst_7 {dimension_numbers = #tpu.dot_dimension_numbers<[1], [0], [0], [1], [0, 0, 1, 1], [], []>} : vector<16x32xbf16>, vector<32x16xbf16>, vector<16x16xf32> -> vector<16x16xf32>
    %c0_8 = arith.constant 0 : index
    %c0_9 = arith.constant 0 : index
    %c0_10 = arith.constant 0 : index
    %14 = vector.load %arg5[%c0_8, %c0_9, %c0_10] : memref<2x48x16xbf16, #tpu.memory_space<vmem>>, vector<1x16x16xbf16>
    %15 = vector.shape_cast %14 : vector<1x16x16xbf16> to vector<16x16xbf16>
    %16 = arith.extf %15 : vector<16x16xbf16> to vector<16x16xf32>
    %17 = vector.broadcast %11 : f32 to vector<16x16xf32>
    %18 = arith.mulf %17, %16 : vector<16x16xf32>
    %19 = arith.addf %13, %18 : vector<16x16xf32>
    %c0_11 = arith.constant 0 : index
    %c0_12 = arith.constant 0 : index
    %c0_13 = arith.constant 0 : index
    %20 = vector.load %arg6[%c0_11, %c0_12, %c0_13] : memref<2x48x16xf32, #tpu.memory_space<vmem>>, vector<1x16x16xf32>
    %21 = vector.shape_cast %20 : vector<1x16x16xf32> to vector<16x16xf32>
    %22 = vector.shape_cast %19 : vector<16x16xf32> to vector<1x16x16xf32>
    tpu.vector_store %arg6[%c0_11, %c0_12, %c0_13], %22 {strides = array<i32>} : memref<2x48x16xf32, #tpu.memory_space<vmem>>, vector<1x16x16xf32>,
    %23 = vector.extract_strided_slice %5 {offsets = [32, 0], sizes = [32, 16], strides = [1, 1]} : vector<96x32xbf16> to vector<32x16xbf16>
    %cst_14 = arith.constant dense<0.000000e+00> : vector<16x16xf32>
    %24 = tpu.matmul %7, %23, %cst_14 {dimension_numbers = #tpu.dot_dimension_numbers<[1], [0], [0], [1], [0, 0, 1, 1], [], []>} : vector<16x32xbf16>, vector<32x16xbf16>, vector<16x16xf32> -> vector<16x16xf32>
    %c0_15 = arith.constant 0 : index
    %c16 = arith.constant 16 : index
    %c0_16 = arith.constant 0 : index
    %25 = vector.load %arg5[%c0_15, %c16, %c0_16] : memref<2x48x16xbf16, #tpu.memory_space<vmem>>, vector<1x16x16xbf16>
    %26 = vector.shape_cast %25 : vector<1x16x16xbf16> to vector<16x16xbf16>
    %27 = arith.extf %26 : vector<16x16xbf16> to vector<16x16xf32>
    %28 = vector.broadcast %11 : f32 to vector<16x16xf32>
    %29 = arith.mulf %28, %27 : vector<16x16xf32>
    %30 = arith.addf %24, %29 : vector<16x16xf32>
    %c0_17 = arith.constant 0 : index
    %c16_18 = arith.constant 16 : index
    %c0_19 = arith.constant 0 : index
    %31 = vector.load %arg6[%c0_17, %c16_18, %c0_19] : memref<2x48x16xf32, #tpu.memory_space<vmem>>, vector<1x16x16xf32>
    %32 = vector.shape_cast %31 : vector<1x16x16xf32> to vector<16x16xf32>
    %33 = vector.shape_cast %30 : vector<16x16xf32> to vector<1x16x16xf32>
    tpu.vector_store %arg6[%c0_17, %c16_18, %c0_19], %33 {strides = array<i32>} : memref<2x48x16xf32, #tpu.memory_space<vmem>>, vector<1x16x16xf32>,
    %34 = vector.extract_strided_slice %5 {offsets = [64, 0], sizes = [32, 16], strides = [1, 1]} : vector<96x32xbf16> to vector<32x16xbf16>
    %cst_20 = arith.constant dense<0.000000e+00> : vector<16x16xf32>
    %35 = tpu.matmul %7, %34, %cst_20 {dimension_numbers = #tpu.dot_dimension_numbers<[1], [0], [0], [1], [0, 0, 1, 1], [], []>} : vector<16x32xbf16>, vector<32x16xbf16>, vector<16x16xf32> -> vector<16x16xf32>
    %c0_21 = arith.constant 0 : index
    %c32 = arith.constant 32 : index
    %c0_22 = arith.constant 0 : index
    %36 = vector.load %arg5[%c0_21, %c32, %c0_22] : memref<2x48x16xbf16, #tpu.memory_space<vmem>>, vector<1x16x16xbf16>
    %37 = vector.shape_cast %36 : vector<1x16x16xbf16> to vector<16x16xbf16>
    %38 = arith.extf %37 : vector<16x16xbf16> to vector<16x16xf32>
    %39 = vector.broadcast %11 : f32 to vector<16x16xf32>
    %40 = arith.mulf %39, %38 : vector<16x16xf32>
    %41 = arith.addf %35, %40 : vector<16x16xf32>
    %c0_23 = arith.constant 0 : index
    %c32_24 = arith.constant 32 : index
    %c0_25 = arith.constant 0 : index
    %42 = vector.load %arg6[%c0_23, %c32_24, %c0_25] : memref<2x48x16xf32, #tpu.memory_space<vmem>>, vector<1x16x16xf32>
    %43 = vector.shape_cast %42 : vector<1x16x16xf32> to vector<16x16xf32>
    %44 = vector.shape_cast %41 : vector<16x16xf32> to vector<1x16x16xf32>
    tpu.vector_store %arg6[%c0_23, %c32_24, %c0_25], %44 {strides = array<i32>} : memref<2x48x16xf32, #tpu.memory_space<vmem>>, vector<1x16x16xf32>,
    %c1 = arith.constant 1 : index
    %c0_26 = arith.constant 0 : index
    %c0_27 = arith.constant 0 : index
    %45 = vector.load %arg3[%c1, %c0_26, %c0_27] : memref<2x16x32xbf16, #tpu.memory_space<vmem>>, vector<1x16x32xbf16>
    %46 = vector.shape_cast %45 : vector<1x16x32xbf16> to vector<16x32xbf16>
    %c2_i32_28 = arith.constant 2 : i32
    %47 = arith.muli %arg0, %c2_i32_28 : i32
    %c1_i32 = arith.constant 1 : i32
    %48 = arith.addi %47, %c1_i32 : i32
    %49 = arith.index_cast %48 : i32 to index
    %50 = memref.load %arg1[%49] : memref<4xf32, #tpu.memory_space<smem>>
    %51 = vector.extract_strided_slice %5 {offsets = [0, 16], sizes = [32, 16], strides = [1, 1]} : vector<96x32xbf16> to vector<32x16xbf16>
    %cst_29 = arith.constant dense<0.000000e+00> : vector<16x16xf32>
    %52 = tpu.matmul %46, %51, %cst_29 {dimension_numbers = #tpu.dot_dimension_numbers<[1], [0], [0], [1], [0, 0, 1, 1], [], []>} : vector<16x32xbf16>, vector<32x16xbf16>, vector<16x16xf32> -> vector<16x16xf32>
    %c1_30 = arith.constant 1 : index
    %c0_31 = arith.constant 0 : index
    %c0_32 = arith.constant 0 : index
    %53 = vector.load %arg5[%c1_30, %c0_31, %c0_32] : memref<2x48x16xbf16, #tpu.memory_space<vmem>>, vector<1x16x16xbf16>
    %54 = vector.shape_cast %53 : vector<1x16x16xbf16> to vector<16x16xbf16>
    %55 = arith.extf %54 : vector<16x16xbf16> to vector<16x16xf32>
    %56 = vector.broadcast %50 : f32 to vector<16x16xf32>
    %57 = arith.mulf %56, %55 : vector<16x16xf32>
    %58 = arith.addf %52, %57 : vector<16x16xf32>
    %c1_33 = arith.constant 1 : index
    %c0_34 = arith.constant 0 : index
    %c0_35 = arith.constant 0 : index
    %59 = vector.load %arg6[%c1_33, %c0_34, %c0_35] : memref<2x48x16xf32, #tpu.memory_space<vmem>>, vector<1x16x16xf32>
    %60 = vector.shape_cast %59 : vector<1x16x16xf32> to vector<16x16xf32>
    %61 = vector.shape_cast %58 : vector<16x16xf32> to vector<1x16x16xf32>
    tpu.vector_store %arg6[%c1_33, %c0_34, %c0_35], %61 {strides = array<i32>} : memref<2x48x16xf32, #tpu.memory_space<vmem>>, vector<1x16x16xf32>,
    %62 = vector.extract_strided_slice %5 {offsets = [32, 16], sizes = [32, 16], strides = [1, 1]} : vector<96x32xbf16> to vector<32x16xbf16>
    %cst_36 = arith.constant dense<0.000000e+00> : vector<16x16xf32>
    %63 = tpu.matmul %46, %62, %cst_36 {dimension_numbers = #tpu.dot_dimension_numbers<[1], [0], [0], [1], [0, 0, 1, 1], [], []>} : vector<16x32xbf16>, vector<32x16xbf16>, vector<16x16xf32> -> vector<16x16xf32>
    %c1_37 = arith.constant 1 : index
    %c16_38 = arith.constant 16 : index
    %c0_39 = arith.constant 0 : index
    %64 = vector.load %arg5[%c1_37, %c16_38, %c0_39] : memref<2x48x16xbf16, #tpu.memory_space<vmem>>, vector<1x16x16xbf16>
    %65 = vector.shape_cast %64 : vector<1x16x16xbf16> to vector<16x16xbf16>
    %66 = arith.extf %65 : vector<16x16xbf16> to vector<16x16xf32>
    %67 = vector.broadcast %50 : f32 to vector<16x16xf32>
    %68 = arith.mulf %67, %66 : vector<16x16xf32>
    %69 = arith.addf %63, %68 : vector<16x16xf32>
    %c1_40 = arith.constant 1 : index
    %c16_41 = arith.constant 16 : index
    %c0_42 = arith.constant 0 : index
    %70 = vector.load %arg6[%c1_40, %c16_41, %c0_42] : memref<2x48x16xf32, #tpu.memory_space<vmem>>, vector<1x16x16xf32>
    %71 = vector.shape_cast %70 : vector<1x16x16xf32> to vector<16x16xf32>
    %72 = vector.shape_cast %69 : vector<16x16xf32> to vector<1x16x16xf32>
    tpu.vector_store %arg6[%c1_40, %c16_41, %c0_42], %72 {strides = array<i32>} : memref<2x48x16xf32, #tpu.memory_space<vmem>>, vector<1x16x16xf32>,
    %73 = vector.extract_strided_slice %5 {offsets = [64, 16], sizes = [32, 16], strides = [1, 1]} : vector<96x32xbf16> to vector<32x16xbf16>
    %cst_43 = arith.constant dense<0.000000e+00> : vector<16x16xf32>
    %74 = tpu.matmul %46, %73, %cst_43 {dimension_numbers = #tpu.dot_dimension_numbers<[1], [0], [0], [1], [0, 0, 1, 1], [], []>} : vector<16x32xbf16>, vector<32x16xbf16>, vector<16x16xf32> -> vector<16x16xf32>
    %c1_44 = arith.constant 1 : index
    %c32_45 = arith.constant 32 : index
    %c0_46 = arith.constant 0 : index
    %75 = vector.load %arg5[%c1_44, %c32_45, %c0_46] : memref<2x48x16xbf16, #tpu.memory_space<vmem>>, vector<1x16x16xbf16>
    %76 = vector.shape_cast %75 : vector<1x16x16xbf16> to vector<16x16xbf16>
    %77 = arith.extf %76 : vector<16x16xbf16> to vector<16x16xf32>
    %78 = vector.broadcast %50 : f32 to vector<16x16xf32>
    %79 = arith.mulf %78, %77 : vector<16x16xf32>
    %80 = arith.addf %74, %79 : vector<16x16xf32>
    %c1_47 = arith.constant 1 : index
    %c32_48 = arith.constant 32 : index
    %c0_49 = arith.constant 0 : index
    %81 = vector.load %arg6[%c1_47, %c32_48, %c0_49] : memref<2x48x16xf32, #tpu.memory_space<vmem>>, vector<1x16x16xf32>
    %82 = vector.shape_cast %81 : vector<1x16x16xf32> to vector<16x16xf32>
    %83 = vector.shape_cast %80 : vector<16x16xf32> to vector<1x16x16xf32>
    tpu.vector_store %arg6[%c1_47, %c32_48, %c0_49], %83 {strides = array<i32>} : memref<2x48x16xf32, #tpu.memory_space<vmem>>, vector<1x16x16xf32>,
    return
  }
  func.func @transform_0(%arg0: i32, %arg1: memref<4xf32, #tpu.memory_space<smem>>) -> (i32, i32) {
    %c0_i32 = arith.constant 0 : i32
    %c0_i32_0 = arith.constant 0 : i32
    %c0_i32_1 = arith.constant 0 : i32
    return %c0_i32, %c0_i32_0 : i32, i32
  }
  func.func @transform_1(%arg0: i32, %arg1: memref<4xf32, #tpu.memory_space<smem>>) -> (i32, i32, i32) {
    %c0_i32 = arith.constant 0 : i32
    %c0_i32_0 = arith.constant 0 : i32
    %c0_i32_1 = arith.constant 0 : i32
    return %arg0, %c0_i32, %c0_i32_0 : i32, i32, i32
  }
  func.func @transform_2(%arg0: i32, %arg1: memref<4xf32, #tpu.memory_space<smem>>) -> (i32, i32, i32) {
    %c0_i32 = arith.constant 0 : i32
    %c0_i32_0 = arith.constant 0 : i32
    %c0_i32_1 = arith.constant 0 : i32
    return %arg0, %c0_i32, %c0_i32_0 : i32, i32, i32
  }
  func.func @transform_3(%arg0: i32, %arg1: memref<4xf32, #tpu.memory_space<smem>>) -> (i32, i32, i32) {
    %c0_i32 = arith.constant 0 : i32
    %c0_i32_0 = arith.constant 0 : i32
    %c0_i32_1 = arith.constant 0 : i32
    return %arg0, %c0_i32, %c0_i32_0 : i32, i32, i32
  }
  func.func @transform_4(%arg0: i32, %arg1: memref<4xf32, #tpu.memory_space<smem>>) -> (i32, i32, i32) {
    %c0_i32 = arith.constant 0 : i32
    %c0_i32_0 = arith.constant 0 : i32
    %c0_i32_1 = arith.constant 0 : i32
    return %arg0, %c0_i32, %c0_i32_0 : i32, i32, i32
  }
}

</mosaic_0001>

<llo_original>
// kernel: tpu_custom_call.1
$region0: #{tpu_custom_call.1}
  #allocation0 [shape = 'u32[]', space=smem, size = 0x4, offset = 0x4, fixed_abs, tag = 'smem constant byte address 0x4 - core index']
  #allocation1 [shape = 'u32[144,128]{1,0:T(1,128)}', space=vmem, size = 0x12000, scoped, tag = 'internal scratch']
  #allocation2 [shape = 's32[1]{0}', space=sflag, size = 0x4, scoped, tag = 'scoped memory for tpu_custom_call.1']
  #allocation3 [shape = 'u8[512]{0}', space=smem, size = 0x200, scoped, tag = 'prefetched SMEM operand 0']
  %s0 = inlined_call_operand.vmem [shape: f32[4], index: 0, kind: input, shape index: {}]
  %s1 = inlined_call_operand.vmem [shape: f32[96,32], index: 1, kind: input, shape index: {}]
  %s2 = inlined_call_operand.vmem [shape: bf16[4,16,32], index: 2, kind: input, shape index: {}]
  %s3 = inlined_call_operand.vmem [shape: bf16[2,32,32], index: 3, kind: input, shape index: {}]
  %s4 = inlined_call_operand.vmem [shape: bf16[4,48,16], index: 4, kind: input, shape index: {}]
  %s5 = inlined_call_operand.vmem [shape: f32[4,48,16], index: 5, kind: output, shape index: {}]
  %s6 = sld [smem:[#allocation0]]
  $region49: #{tpu_custom_call.1} parent=0
    _
  %s8 = ssub.s32 1, %s6
  %s9 = scalar_select 0, %s8, %s6
  %s10 = sshll.u32 %s0, 4
  %s11 = int_to_ptr.vmem [resolvable:$true] %s10
  %13 = dma.vmem_to_smem %s11, 16, [#allocation3], [#allocation2]
  %14 = dma.done [#allocation2], 16
  %15 = sfence
  loop: start=0, step=1, limit=4
  $region2: #{tpu_custom_call.1} parent=0 // loop_pre_header
    _
  $region3: #{tpu_custom_call.1} parent=0 // loop_header
    %s17 = sphi 0, %s21
    %p18 = scmp.ge.s32.totalorder %s17, 4
    %s25 = sphi 0, %s25
    %s27 = sphi 0, %s25
    %s28 = sphi 0, %s27
    %s42 = sphi 0, %s28
    %s48 = sphi 0, %s50
    %s51 = sphi 0, %s48
    %s52 = sphi 0, %s51
    %s68 = sphi 0, %s52
    %s74 = sphi 0, %s76
    %s77 = sphi 0, %s74
    %s78 = sphi 0, %s77
    %s94 = sphi 0, %s78
    %s100 = sphi 0, %s102
    %s103 = sphi 0, %s100
    %s104 = sphi 0, %s103
    %s120 = sphi 0, %s104
    %s126 = sphi 0, %s128
    %s129 = sphi 0, %s126
    %s130 = sphi 0, %s129
    %s146 = sphi 0, %s130
  $region4: #{tpu_custom_call.1} parent=0 // loop_header_branch
    %20 = sbr.rel (%p18) target = $region8
  $region5: #{tpu_custom_call.1} parent=0 // loop_body
    %s22 = ssub.s32 %s17, 1
    %s23 = ssub.s32 %s17, 2
    %s24 = sadd.s32 %s17, 1
    %s26 = sadd.s32 %s25, 1
    %p29 = scmp.eq.s32.totalorder %s17, 1
    %p30 = scmp.ne.s32.totalorder %s25, %s27
    %p31 = scmp.eq.s32.totalorder %s17, 0
    %p32 = por %p30, %p31
    %p33 = scmp.ne.s32.totalorder %s25, %s27
    %p34 = scmp.eq.s32.totalorder %s22, 1
    %p35 = por %p33, %p34
    %p36 = scmp.ne.s32.totalorder %s27, %s28
    %p37 = scmp.eq.s32.totalorder %s22, 0
    %p38 = por %p36, %p37
    %p39 = scmp.ne.s32.totalorder %s27, %s28
    %p40 = scmp.eq.s32.totalorder %s23, 1
    %p41 = por %p39, %p40
    %p43 = scmp.ne.s32.totalorder %s28, %s42
    %p44 = scmp.eq.s32.totalorder %s23, 0
    %p45 = por %p43, %p44
    %s46 = ssub.s32 %s17, %s24
    %p47 = scmp.eq.s32.totalorder %s46, 0
    %s49 = sadd.s32 %s48, 1
    %s50 = scalar_select %p47, %s48, %s49
    %p53 = pneg %p47
    %p54 = scmp.eq.s32.totalorder %s17, 1
    %p55 = por %p53, %p54
    %p56 = scmp.ne.s32.totalorder %s48, %s51
    %p57 = scmp.eq.s32.totalorder %s17, 0
    %p58 = por %p56, %p57
    %p59 = scmp.ne.s32.totalorder %s48, %s51
    %p60 = scmp.eq.s32.totalorder %s22, 1
    %p61 = por %p59, %p60
    %p62 = scmp.ne.s32.totalorder %s51, %s52
    %p63 = scmp.eq.s32.totalorder %s22, 0
    %p64 = por %p62, %p63
    %p65 = scmp.ne.s32.totalorder %s51, %s52
    %p66 = scmp.eq.s32.totalorder %s23, 1
    %p67 = por %p65, %p66
    %p69 = scmp.ne.s32.totalorder %s52, %s68
    %p70 = scmp.eq.s32.totalorder %s23, 0
    %p71 = por %p69, %p70
    %s72 = ssub.s32 %s17, %s24
    %p73 = scmp.eq.s32.totalorder %s72, 0
    %s75 = sadd.s32 %s74, 1
    %s76 = scalar_select %p73, %s74, %s75
    %p79 = pneg %p73
    %p80 = scmp.eq.s32.totalorder %s17, 1
    %p81 = por %p79, %p80
    %p82 = scmp.ne.s32.totalorder %s74, %s77
    %p83 = scmp.eq.s32.totalorder %s17, 0
    %p84 = por %p82, %p83
    %p85 = scmp.ne.s32.totalorder %s74, %s77
    %p86 = scmp.eq.s32.totalorder %s22, 1
    %p87 = por %p85, %p86
    %p88 = scmp.ne.s32.totalorder %s77, %s78
    %p89 = scmp.eq.s32.totalorder %s22, 0
    %p90 = por %p88, %p89
    %p91 = scmp.ne.s32.totalorder %s77, %s78
    %p92 = scmp.eq.s32.totalorder %s23, 1
    %p93 = por %p91, %p92
    %p95 = scmp.ne.s32.totalorder %s78, %s94
    %p96 = scmp.eq.s32.totalorder %s23, 0
    %p97 = por %p95, %p96
    %s98 = ssub.s32 %s17, %s24
    %p99 = scmp.eq.s32.totalorder %s98, 0
    %s101 = sadd.s32 %s100, 1
    %s102 = scalar_select %p99, %s100, %s101
    %p105 = pneg %p99
    %p106 = scmp.eq.s32.totalorder %s17, 1
    %p107 = por %p105, %p106
    %p108 = scmp.ne.s32.totalorder %s100, %s103
    %p109 = scmp.eq.s32.totalorder %s17, 0
    %p110 = por %p108, %p109
    %p111 = scmp.ne.s32.totalorder %s100, %s103
    %p112 = scmp.eq.s32.totalorder %s22, 1
    %p113 = por %p111, %p112
    %p114 = scmp.ne.s32.totalorder %s103, %s104
    %p115 = scmp.eq.s32.totalorder %s22, 0
    %p116 = por %p114, %p115
    %p117 = scmp.ne.s32.totalorder %s103, %s104
    %p118 = scmp.eq.s32.totalorder %s23, 1
    %p119 = por %p117, %p118
    %p121 = scmp.ne.s32.totalorder %s104, %s120
    %p122 = scmp.eq.s32.totalorder %s23, 0
    %p123 = por %p121, %p122
    %s124 = ssub.s32 %s17, %s24
    %p125 = scmp.eq.s32.totalorder %s124, 0
    %s127 = sadd.s32 %s126, 1
    %s128 = scalar_select %p125, %s126, %s127
    %p131 = pneg %p125
    %p132 = scmp.eq.s32.totalorder %s17, 1
    %p133 = por %p131, %p132
    %p134 = scmp.ne.s32.totalorder %s126, %s129
    %p135 = scmp.eq.s32.totalorder %s17, 0
    %p136 = por %p134, %p135
    %p137 = scmp.ne.s32.totalorder %s126, %s129
    %p138 = scmp.eq.s32.totalorder %s22, 1
    %p139 = por %p137, %p138
    %p140 = scmp.ne.s32.totalorder %s129, %s130
    %p141 = scmp.eq.s32.totalorder %s22, 0
    %p142 = por %p140, %p141
    %p143 = scmp.ne.s32.totalorder %s129, %s130
    %p144 = scmp.eq.s32.totalorder %s23, 1
    %p145 = por %p143, %p144
    %p147 = scmp.ne.s32.totalorder %s130, %s146
    %p148 = scmp.eq.s32.totalorder %s23, 0
    %p149 = por %p147, %p148
    %p150 = scmp.le.s32.totalorder 1, %s17
    %p151 = scmp.lt.s32.totalorder %s17, 3
    %p152 = pnand %p150, %p151
    %p153 = pneg %p152
    // Predicated region
    $region9: #{tpu_custom_call.1} parent=5 // pred_check
      _
    $region10: #{tpu_custom_call.1} parent=5 // pred_check_branch
      %155 = sbr.rel (%p152) target = $region12
    $region11: #{tpu_custom_call.1} parent=5 // pred_region
      %s156 = ssub.s32 %s17, 1
      // Predicated region
      $region13: #{tpu_custom_call.1} parent=11 // pred_check
        %p157 = pneg %p38
      $region14: #{tpu_custom_call.1} parent=11 // pred_check_branch
        %159 = sbr.rel (%p157) target = $region16
      $region15: #{tpu_custom_call.1} parent=11 // pred_region
        _
      $region16: #{tpu_custom_call.1} parent=11 // pred_fallthru
        _
    $region12: #{tpu_custom_call.1} parent=5 // pred_fallthru
      _
    %p160 = scmp.lt.s32.totalorder %s17, 2
    // Predicated region
    $region17: #{tpu_custom_call.1} parent=5 // pred_check
      %p161 = pneg %p160
    $region18: #{tpu_custom_call.1} parent=5 // pred_check_branch
      %163 = sbr.rel (%p161) target = $region20
    $region19: #{tpu_custom_call.1} parent=5 // pred_region
      // Predicated region
      $region21: #{tpu_custom_call.1} parent=19 // pred_check
        %p164 = pneg %p58
      $region22: #{tpu_custom_call.1} parent=19 // pred_check_branch
        %166 = sbr.rel (%p164) target = $region24
      $region23: #{tpu_custom_call.1} parent=19 // pred_region
        %s167 = smul.u32 2, %s17
        %p168 = scmp.lt.s32.totalorder %s167, 3
        %s169 = scalar_select %p168, %s167, 3
        %s170 = smul.addr %s169, 2
        %s171 = smul.addr %s170, 4
        %s172 = scalar_lea.vmem %s2, %s171
        %s173 = smul.u32 2, %s17
      $region24: #{tpu_custom_call.1} parent=19 // pred_fallthru
        _
      // Predicated region
      $region25: #{tpu_custom_call.1} parent=19 // pred_check
        %p174 = pneg %p84
      $region26: #{tpu_custom_call.1} parent=19 // pred_check_branch
        %176 = sbr.rel (%p174) target = $region28
      $region27: #{tpu_custom_call.1} parent=19 // pred_region
        %p177 = scmp.lt.s32.totalorder %s17, 1
        %s178 = scalar_select %p177, %s17, 1
        %s179 = smul.addr %s178, 4
        %s180 = smul.addr %s179, 4
        %s181 = scalar_lea.vmem %s3, %s180
      $region28: #{tpu_custom_call.1} parent=19 // pred_fallthru
        _
      // Predicated region
      $region29: #{tpu_custom_call.1} parent=19 // pred_check
        %p182 = pneg %p110
      $region30: #{tpu_custom_call.1} parent=19 // pred_check_branch
        %184 = sbr.rel (%p182) target = $region32
      $region31: #{tpu_custom_call.1} parent=19 // pred_region
        %s185 = smul.u32 2, %s17
        %p186 = scmp.lt.s32.totalorder %s185, 3
        %s187 = scalar_select %p186, %s185, 3
        %s188 = smul.addr %s187, 6
        %s189 = smul.addr %s188, 4
        %s190 = scalar_lea.vmem %s4, %s189
        %s191 = smul.u32 2, %s17
      $region32: #{tpu_custom_call.1} parent=19 // pred_fallthru
        _
    $region20: #{tpu_custom_call.1} parent=5 // pred_fallthru
      _
    %p192 = scmp.le.s32.totalorder 1, %s17
    %p193 = scmp.lt.s32.totalorder %s17, 3
    %p194 = pnand %p192, %p193
    %p195 = pneg %p194
    // Predicated region
    $region33: #{tpu_custom_call.1} parent=5 // pred_check
      _
    $region34: #{tpu_custom_call.1} parent=5 // pred_check_branch
      %197 = sbr.rel (%p194) target = $region36
    $region35: #{tpu_custom_call.1} parent=5 // pred_region
      %s198 = ssub.s32 %s17, 1
      %p199 = pneg %p38
      %p200 = pneg %p35
      %s201 = smul.u32 2, %s22
      %p202 = scmp.lt.s32.totalorder %s201, 3
      %s203 = scalar_select %p202, %s201, 3
      %s204 = smul.addr %s203, 2
      %s205 = smul.addr %s204, 4
      %s206 = scalar_lea.vmem %s2, %s205
      %p207 = pneg %p64
      %p208 = pneg %p61
      %p209 = scmp.lt.s32.totalorder %s22, 1
      %s210 = scalar_select %p209, %s22, 1
      %s211 = smul.addr %s210, 4
      %s212 = smul.addr %s211, 4
      %s213 = scalar_lea.vmem %s3, %s212
      %p214 = pneg %p90
      %p215 = pneg %p87
      %s216 = smul.u32 2, %s22
      %p217 = scmp.lt.s32.totalorder %s216, 3
      %s218 = scalar_select %p217, %s216, 3
      %s219 = smul.addr %s218, 6
      %s220 = smul.addr %s219, 4
      %s221 = scalar_lea.vmem %s4, %s220
      %p222 = pneg %p116
      %p223 = pneg %p113
      %p224 = pneg %p142
      %p225 = pneg %p139
      %s226 = smul.u32 2, %s22
      %p227 = scmp.lt.s32.totalorder %s226, 3
      %s228 = scalar_select %p227, %s226, 3
      %s229 = smul.addr %s228, 6
      %s230 = smul.addr %s229, 8
      %s231 = scalar_lea.vmem %s5, %s230
      %s232 = smul.u32 2, %s22
      %p233 = scmp.lt.s32.totalorder %s232, 3
      %s234 = scalar_select %p233, %s232, 3
      %s235 = smul.addr %s234, 2
      %s236 = smul.addr %s235, 4
      %s237 = scalar_lea.vmem %s2, %s236
      %s238 = smul.u32 2, %s22
      %p239 = scmp.lt.s32.totalorder %s22, 1
      %s240 = scalar_select %p239, %s22, 1
      %s241 = smul.addr %s240, 4
      %s242 = smul.addr %s241, 4
      %s243 = scalar_lea.vmem %s3, %s242
      %s244 = smul.u32 2, %s22
      %p245 = scmp.lt.s32.totalorder %s244, 3
      %s246 = scalar_select %p245, %s244, 3
      %s247 = smul.addr %s246, 6
      %s248 = smul.addr %s247, 4
      %s249 = scalar_lea.vmem %s4, %s248
      %s250 = smul.u32 2, %s22
      %s251 = smul.u32 2, %s22
      %p252 = scmp.lt.s32.totalorder %s251, 3
      %s253 = scalar_select %p252, %s251, 3
      %s254 = smul.addr %s253, 6
      %s255 = smul.addr %s254, 8
      %s256 = scalar_lea.vmem %s5, %s255
      %s257 = smul.u32 2, %s22
      %v259 = vld [vmem:[%s1] sm:$0xff]
      %v260 = vld [vmem:[%s1 + $0x8] sm:$0xff]
      %v261 = vld [vmem:[%s1 + $0x10] sm:$0xff]
      %v262 = vld [vmem:[%s1 + $0x18] sm:$0xff]
      %v263 = vld [vmem:[%s1 + $0x20] sm:$0xff]
      %v264 = vld [vmem:[%s1 + $0x28] sm:$0xff]
      %v265 = vld [vmem:[%s1 + $0x30] sm:$0xff]
      %v266 = vld [vmem:[%s1 + $0x38] sm:$0xff]
      %v267 = vld [vmem:[%s1 + $0x40] sm:$0xff]
      %v268 = vld [vmem:[%s1 + $0x48] sm:$0xff]
      %v269 = vld [vmem:[%s1 + $0x50] sm:$0xff]
      %v270 = vld [vmem:[%s1 + $0x58] sm:$0xff]
      %v271 = vpack.c.bf16 %v260, %v259
      %v272 = vpack.c.bf16 %v262, %v261
      %v273 = vpack.c.bf16 %v264, %v263
      %v274 = vpack.c.bf16 %v266, %v265
      %v275 = vpack.c.bf16 %v268, %v267
      %v276 = vpack.c.bf16 %v270, %v269
      %v277 = vld [vmem:[%s243] sm:$0xf]
      %v278 = vld [vmem:[%s243 + $0x4] sm:$0xf]
      %v279 = vld [vmem:[%s243 + $0x8] sm:$0xf]
      %v280 = vld [vmem:[%s243 + $0xc] sm:$0xf]
      %v285 = vunpack.c.l.b16 %v277
      %v286 = vunpack.c.l.b16 %v278
      %v287 = vunpack.c.l.b16 %v279
      %v288 = vunpack.c.l.b16 %v280
      %v289 = vpack.c.b16 %v286, %v285
      %v290 = vpack.c.b16 %v288, %v287
      %vm293 = vcmask 261120
      %v295 = vsel %vm293, %v271, 0
      %v298 = vsel %vm293, %v272, 0
      %v301 = vsel %vm293, %v273, 0
      %v304 = vsel %vm293, %v274, 0
      %v307 = vsel %vm293, %v275, 0
      %v310 = vsel %vm293, %v276, 0
      %312 = vmatprep.subr.bf16.mxu0 0
      %313 = vmatpush1.bf16.msra.mxu0 %v289
      %314 = vmatprep.subr.bf16.mxu0 0
      %315 = vmatpush1.bf16.msra.mxu0 %v290
      %316 = vmatprep.subr.bf16.mxu0 0
      %317 = vmatpush1.bf16.msra.mxu0 0
      %318 = vmatprep.subr.bf16.mxu0 0
      %319 = vmatpush1.bf16.msra.mxu0 0
      %320 = vmatprep.subr.bf16.mxu0 0
      %321 = vmatpush1.bf16.msra.mxu0 0
      %322 = vmatprep.subr.bf16.mxu0 0
      %323 = vmatpush1.bf16.msra.mxu0 0
      %324 = vmatprep.subr.bf16.mxu0 0
      %325 = vmatpush1.bf16.msra.mxu0 0
      %326 = vmatprep.subr.bf16.mxu0 0
      %327 = vmatpush1.bf16.msra.mxu0 0
      %328 = vmatprep.subr.bf16.mxu0 0
      %329 = vmatpush1.bf16.msra.mxu0 0
      %330 = vmatprep.subr.bf16.mxu0 0
      %331 = vmatpush1.bf16.msra.mxu0 0
      %332 = vmatprep.subr.bf16.mxu0 0
      %333 = vmatpush1.bf16.msra.mxu0 0
      %334 = vmatprep.subr.bf16.mxu0 0
      %335 = vmatpush1.bf16.msra.mxu0 0
      %336 = vmatprep.subr.bf16.mxu0 0
      %337 = vmatpush1.bf16.msra.mxu0 0
      %338 = vmatprep.subr.bf16.mxu0 0
      %339 = vmatpush1.bf16.msra.mxu0 0
      %340 = vmatprep.subr.bf16.mxu0 0
      %341 = vmatpush1.bf16.msra.mxu0 0
      %342 = vmatprep.subr.bf16.mxu0 0
      %343 = vmatpush1.bf16.msra.mxu0 0
      %344 = vmatprep.mubr.bf16.mxu0 0
      %345 = vmatmul.mubr.bf16.gmra.mrb[0].mxu0 %v295
      %v346 = vpop.f32.mrb[0].mxu0
      %v347 = vadd.f32 0.0, %v346
      %v348 = vpop.f32.mrb[0].mxu0
      %v349 = vpop.f32.mrb[0].mxu0
      %v350 = vadd.f32 0.0, %v349
      %v351 = vpop.f32.mrb[0].mxu0
      %352 = vmatprep.mubr.bf16.mxu0 0
      %353 = vmatmul.mubr.bf16.gmra.mrb[0].mxu0 %v298
      %v354 = vpop.f32.mrb[0].mxu0
      %v355 = vadd.f32 0.0, %v354
      %v356 = vpop.f32.mrb[0].mxu0
      %v357 = vpop.f32.mrb[0].mxu0
      %v358 = vadd.f32 0.0, %v357
      %v359 = vpop.f32.mrb[0].mxu0
      %360 = vmatprep.mubr.bf16.mxu0 0
      %361 = vmatmul.mubr.bf16.gmra.mrb[0].mxu0 %v301
      %v362 = vpop.f32.mrb[0].mxu0
      %v363 = vadd.f32 0.0, %v362
      %v364 = vpop.f32.mrb[0].mxu0
      %v365 = vpop.f32.mrb[0].mxu0
      %v366 = vadd.f32 0.0, %v365
      %v367 = vpop.f32.mrb[0].mxu0
      %368 = vmatprep.mubr.bf16.mxu0 0
      %369 = vmatmul.mubr.bf16.gmra.mrb[0].mxu0 %v304
      %v370 = vpop.f32.mrb[0].mxu0
      %v371 = vadd.f32 0.0, %v370
      %v372 = vpop.f32.mrb[0].mxu0
      %v373 = vpop.f32.mrb[0].mxu0
      %v374 = vadd.f32 0.0, %v373
      %v375 = vpop.f32.mrb[0].mxu0
      %376 = vmatprep.mubr.bf16.mxu0 0
      %377 = vmatmul.mubr.bf16.gmra.mrb[0].mxu0 %v307
      %v378 = vpop.f32.mrb[0].mxu0
      %v379 = vadd.f32 0.0, %v378
      %v380 = vpop.f32.mrb[0].mxu0
      %v381 = vpop.f32.mrb[0].mxu0
      %v382 = vadd.f32 0.0, %v381
      %v383 = vpop.f32.mrb[0].mxu0
      %384 = vmatprep.mubr.bf16.mxu0 0
      %385 = vmatmul.mubr.bf16.gmra.mrb[0].mxu0 %v310
      %v386 = vpop.f32.mrb[0].mxu0
      %v387 = vadd.f32 0.0, %v386
      %v388 = vpop.f32.mrb[0].mxu0
      %v389 = vpop.f32.mrb[0].mxu0
      %v390 = vadd.f32 0.0, %v389
      %v391 = vpop.f32.mrb[0].mxu0
      %392 = vdwg.mxu0
      %v393 = vpack.c.bf16 %v350, %v347
      %v394 = vpack.c.bf16 %v358, %v355
      %v395 = vpack.c.bf16 %v366, %v363
      %v396 = vpack.c.bf16 %v374, %v371
      %v397 = vpack.c.bf16 %v382, %v379
      %v398 = vpack.c.bf16 %v390, %v387
      %v399 = vld [vmem:[%s237] sm:$0xf]
      %v400 = vld [vmem:[%s237 + $0x4] sm:$0xf]
      %s401 = smul.u32 %s22, 2
      %s402 = sld [smem:[#allocation3 + %s401]]
      %v403 = vld [vmem:[%s249] sm:$0xf]
      %v404 = vld [vmem:[%s249 + $0x4] sm:$0xf]
      %v405 = vunpack.c.l.bf16 %v403
      %v406 = vunpack.c.l.bf16 %v404
      %v407 = vstv %s402
      %v408 = vmul.f32 %v407, %v405
      %v409 = vmul.f32 %v407, %v406
      %v412 = vunpack.c.l.b16 %v399
      %v413 = vunpack.c.l.b16 %v400
      %v414 = vpack.c.b16 %v413, %v412
      %v416 = vsel %vm293, %v414, 0
      %418 = vmatprep.subr.bf16.mxu0 0
      %419 = vmatpush1.bf16.msra.mxu0 %v393
      %420 = vmatprep.subr.bf16.mxu0 0
      %421 = vmatpush1.bf16.msra.mxu0 %v394
      %422 = vmatprep.subr.bf16.mxu0 0
      %423 = vmatpush1.bf16.msra.mxu0 0
      %424 = vmatprep.subr.bf16.mxu0 0
      %425 = vmatpush1.bf16.msra.mxu0 0
      %426 = vmatprep.subr.bf16.mxu0 0
      %427 = vmatpush1.bf16.msra.mxu0 0
      %428 = vmatprep.subr.bf16.mxu0 0
      %429 = vmatpush1.bf16.msra.mxu0 0
      %430 = vmatprep.subr.bf16.mxu0 0
      %431 = vmatpush1.bf16.msra.mxu0 0
      %432 = vmatprep.subr.bf16.mxu0 0
      %433 = vmatpush1.bf16.msra.mxu0 0
      %434 = vmatprep.subr.bf16.mxu0 0
      %435 = vmatpush1.bf16.msra.mxu0 0
      %436 = vmatprep.subr.bf16.mxu0 0
      %437 = vmatpush1.bf16.msra.mxu0 0
      %438 = vmatprep.subr.bf16.mxu0 0
      %439 = vmatpush1.bf16.msra.mxu0 0
      %440 = vmatprep.subr.bf16.mxu0 0
      %441 = vmatpush1.bf16.msra.mxu0 0
      %442 = vmatprep.subr.bf16.mxu0 0
      %443 = vmatpush1.bf16.msra.mxu0 0
      %444 = vmatprep.subr.bf16.mxu0 0
      %445 = vmatpush1.bf16.msra.mxu0 0
      %446 = vmatprep.subr.bf16.mxu0 0
      %447 = vmatpush1.bf16.msra.mxu0 0
      %448 = vmatprep.subr.bf16.mxu0 0
      %449 = vmatpush1.bf16.msra.mxu0 0
      %450 = vmatprep.mubr.bf16.mxu0 0
      %451 = vmatmul.mubr.bf16.gmra.mrb[0].mxu0 %v416
      %v452 = vpop.f32.mrb[0].mxu0
      %v453 = vadd.f32 %v408, %v452
      %v454 = vpop.f32.mrb[0].mxu0
      %v455 = vpop.f32.mrb[0].mxu0
      %v456 = vadd.f32 %v409, %v455
      %v457 = vpop.f32.mrb[0].mxu0
      %458 = vdwg.mxu0
      %vm459 = vcmask 130048
      %460 = vst.msk [vmem:[%s256] sm:$0xff] %vm459, %v453
      %461 = vst.msk [vmem:[%s256 + $0x8] sm:$0xff] %vm459, %v456
      %v462 = vld [vmem:[%s249 + $0x8] sm:$0xf]
      %v463 = vld [vmem:[%s249 + $0xc] sm:$0xf]
      %v464 = vunpack.c.l.bf16 %v462
      %v465 = vunpack.c.l.bf16 %v463
      %v466 = vmul.f32 %v407, %v464
      %v467 = vmul.f32 %v407, %v465
      %468 = vmatprep.subr.bf16.mxu0 0
      %469 = vmatpush1.bf16.msra.mxu0 %v395
      %470 = vmatprep.subr.bf16.mxu0 0
      %471 = vmatpush1.bf16.msra.mxu0 %v396
      %472 = vmatprep.subr.bf16.mxu0 0
      %473 = vmatpush1.bf16.msra.mxu0 0
      %474 = vmatprep.subr.bf16.mxu0 0
      %475 = vmatpush1.bf16.msra.mxu0 0
      %476 = vmatprep.subr.bf16.mxu0 0
      %477 = vmatpush1.bf16.msra.mxu0 0
      %478 = vmatprep.subr.bf16.mxu0 0
      %479 = vmatpush1.bf16.msra.mxu0 0
      %480 = vmatprep.subr.bf16.mxu0 0
      %481 = vmatpush1.bf16.msra.mxu0 0
      %482 = vmatprep.subr.bf16.mxu0 0
      %483 = vmatpush1.bf16.msra.mxu0 0
      %484 = vmatprep.subr.bf16.mxu0 0
      %485 = vmatpush1.bf16.msra.mxu0 0
      %486 = vmatprep.subr.bf16.mxu0 0
      %487 = vmatpush1.bf16.msra.mxu0 0
      %488 = vmatprep.subr.bf16.mxu0 0
      %489 = vmatpush1.bf16.msra.mxu0 0
      %490 = vmatprep.subr.bf16.mxu0 0
      %491 = vmatpush1.bf16.msra.mxu0 0
      %492 = vmatprep.subr.bf16.mxu0 0
      %493 = vmatpush1.bf16.msra.mxu0 0
      %494 = vmatprep.subr.bf16.mxu0 0
      %495 = vmatpush1.bf16.msra.mxu0 0
      %496 = vmatprep.subr.bf16.mxu0 0
      %497 = vmatpush1.bf16.msra.mxu0 0
      %498 = vmatprep.subr.bf16.mxu0 0
      %499 = vmatpush1.bf16.msra.mxu0 0
      %500 = vmatprep.mubr.bf16.mxu0 0
      %501 = vmatmul.mubr.bf16.gmra.mrb[0].mxu0 %v416
      %v502 = vpop.f32.mrb[0].mxu0
      %v503 = vadd.f32 %v466, %v502
      %v504 = vpop.f32.mrb[0].mxu0
      %v505 = vpop.f32.mrb[0].mxu0
      %v506 = vadd.f32 %v467, %v505
      %v507 = vpop.f32.mrb[0].mxu0
      %508 = vdwg.mxu0
      %509 = vst.msk [vmem:[%s256 + $0x10] sm:$0xff] %vm459, %v503
      %510 = vst.msk [vmem:[%s256 + $0x18] sm:$0xff] %vm459, %v506
      %v511 = vld [vmem:[%s249 + $0x10] sm:$0xf]
      %v512 = vld [vmem:[%s249 + $0x14] sm:$0xf]
      %v513 = vunpack.c.l.bf16 %v511
      %v514 = vunpack.c.l.bf16 %v512
      %v515 = vmul.f32 %v407, %v513
      %v516 = vmul.f32 %v407, %v514
      %517 = vmatprep.subr.bf16.mxu0 0
      %518 = vmatpush1.bf16.msra.mxu0 %v397
      %519 = vmatprep.subr.bf16.mxu0 0
      %520 = vmatpush1.bf16.msra.mxu0 %v398
      %521 = vmatprep.subr.bf16.mxu0 0
      %522 = vmatpush1.bf16.msra.mxu0 0
      %523 = vmatprep.subr.bf16.mxu0 0
      %524 = vmatpush1.bf16.msra.mxu0 0
      %525 = vmatprep.subr.bf16.mxu0 0
      %526 = vmatpush1.bf16.msra.mxu0 0
      %527 = vmatprep.subr.bf16.mxu0 0
      %528 = vmatpush1.bf16.msra.mxu0 0
      %529 = vmatprep.subr.bf16.mxu0 0
      %530 = vmatpush1.bf16.msra.mxu0 0
      %531 = vmatprep.subr.bf16.mxu0 0
      %532 = vmatpush1.bf16.msra.mxu0 0
      %533 = vmatprep.subr.bf16.mxu0 0
      %534 = vmatpush1.bf16.msra.mxu0 0
      %535 = vmatprep.subr.bf16.mxu0 0
      %536 = vmatpush1.bf16.msra.mxu0 0
      %537 = vmatprep.subr.bf16.mxu0 0
      %538 = vmatpush1.bf16.msra.mxu0 0
      %539 = vmatprep.subr.bf16.mxu0 0
      %540 = vmatpush1.bf16.msra.mxu0 0
      %541 = vmatprep.subr.bf16.mxu0 0
      %542 = vmatpush1.bf16.msra.mxu0 0
      %543 = vmatprep.subr.bf16.mxu0 0
      %544 = vmatpush1.bf16.msra.mxu0 0
      %545 = vmatprep.subr.bf16.mxu0 0
      %546 = vmatpush1.bf16.msra.mxu0 0
      %547 = vmatprep.subr.bf16.mxu0 0
      %548 = vmatpush1.bf16.msra.mxu0 0
      %549 = vmatprep.mubr.bf16.mxu0 0
      %550 = vmatmul.mubr.bf16.gmra.mrb[0].mxu0 %v416
      %v551 = vpop.f32.mrb[0].mxu0
      %v552 = vadd.f32 %v515, %v551
      %v553 = vpop.f32.mrb[0].mxu0
      %v554 = vpop.f32.mrb[0].mxu0
      %v555 = vadd.f32 %v516, %v554
      %v556 = vpop.f32.mrb[0].mxu0
      %557 = vdwg.mxu0
      %558 = vst.msk [vmem:[%s256 + $0x20] sm:$0xff] %vm459, %v552
      %559 = vst.msk [vmem:[%s256 + $0x28] sm:$0xff] %vm459, %v555
      %s560 = scalar_lea.vmem %s237, 8
      %v561 = vld [vmem:[%s560] sm:$0xf]
      %v562 = vld [vmem:[%s560 + $0x4] sm:$0xf]
      %s563 = sadd.s32 %s401, 1
      %s564 = sld [smem:[#allocation3 + %s563]]
      %s565 = scalar_lea.vmem %s249, 24
      %v566 = vld [vmem:[%s565] sm:$0xf]
      %v567 = vld [vmem:[%s565 + $0x4] sm:$0xf]
      %v568 = vunpack.c.l.bf16 %v566
      %v569 = vunpack.c.l.bf16 %v567
      %v570 = vstv %s564
      %v571 = vmul.f32 %v570, %v568
      %v572 = vmul.f32 %v570, %v569
      %v575 = vunpack.c.l.b16 %v561
      %v576 = vunpack.c.l.b16 %v562
      %v577 = vpack.c.b16 %v576, %v575
      %580 = vrot.lane.b32.xlu0 %v393, 112
      %v581 = vpop.permute.xlu0 %580
      %582 = vrot.lane.b32.xlu0 %v394, 112
      %v583 = vpop.permute.xlu0 %582
      %v587 = vsel %vm293, %v577, 0
      %589 = vmatprep.subr.bf16.mxu0 0
      %590 = vmatpush1.bf16.msra.mxu0 %v581
      %591 = vmatprep.subr.bf16.mxu0 0
      %592 = vmatpush1.bf16.msra.mxu0 %v583
      %593 = vmatprep.subr.bf16.mxu0 0
      %594 = vmatpush1.bf16.msra.mxu0 0
      %595 = vmatprep.subr.bf16.mxu0 0
      %596 = vmatpush1.bf16.msra.mxu0 0
      %597 = vmatprep.subr.bf16.mxu0 0
      %598 = vmatpush1.bf16.msra.mxu0 0
      %599 = vmatprep.subr.bf16.mxu0 0
      %600 = vmatpush1.bf16.msra.mxu0 0
      %601 = vmatprep.subr.bf16.mxu0 0
      %602 = vmatpush1.bf16.msra.mxu0 0
      %603 = vmatprep.subr.bf16.mxu0 0
      %604 = vmatpush1.bf16.msra.mxu0 0
      %605 = vmatprep.subr.bf16.mxu0 0
      %606 = vmatpush1.bf16.msra.mxu0 0
      %607 = vmatprep.subr.bf16.mxu0 0
      %608 = vmatpush1.bf16.msra.mxu0 0
      %609 = vmatprep.subr.bf16.mxu0 0
      %610 = vmatpush1.bf16.msra.mxu0 0
      %611 = vmatprep.subr.bf16.mxu0 0
      %612 = vmatpush1.bf16.msra.mxu0 0
      %613 = vmatprep.subr.bf16.mxu0 0
      %614 = vmatpush1.bf16.msra.mxu0 0
      %615 = vmatprep.subr.bf16.mxu0 0
      %616 = vmatpush1.bf16.msra.mxu0 0
      %617 = vmatprep.subr.bf16.mxu0 0
      %618 = vmatpush1.bf16.msra.mxu0 0
      %619 = vmatprep.subr.bf16.mxu0 0
      %620 = vmatpush1.bf16.msra.mxu0 0
      %621 = vmatprep.mubr.bf16.mxu0 0
      %622 = vmatmul.mubr.bf16.gmra.mrb[0].mxu0 %v587
      %v623 = vpop.f32.mrb[0].mxu0
      %v624 = vadd.f32 %v571, %v623
      %v625 = vpop.f32.mrb[0].mxu0
      %v626 = vpop.f32.mrb[0].mxu0
      %v627 = vadd.f32 %v572, %v626
      %v628 = vpop.f32.mrb[0].mxu0
      %629 = vdwg.mxu0
      %s630 = scalar_lea.vmem %s256, 48
      %631 = vst.msk [vmem:[%s630] sm:$0xff] %vm459, %v624
      %632 = vst.msk [vmem:[%s630 + $0x8] sm:$0xff] %vm459, %v627
      %v633 = vld [vmem:[%s565 + $0x8] sm:$0xf]
      %v634 = vld [vmem:[%s565 + $0xc] sm:$0xf]
      %v635 = vunpack.c.l.bf16 %v633
      %v636 = vunpack.c.l.bf16 %v634
      %v637 = vmul.f32 %v570, %v635
      %v638 = vmul.f32 %v570, %v636
      %641 = vrot.lane.b32.xlu0 %v395, 112
      %v642 = vpop.permute.xlu0 %641
      %643 = vrot.lane.b32.xlu0 %v396, 112
      %v644 = vpop.permute.xlu0 %643
      %647 = vmatprep.subr.bf16.mxu0 0
      %648 = vmatpush1.bf16.msra.mxu0 %v642
      %649 = vmatprep.subr.bf16.mxu0 0
      %650 = vmatpush1.bf16.msra.mxu0 %v644
      %651 = vmatprep.subr.bf16.mxu0 0
      %652 = vmatpush1.bf16.msra.mxu0 0
      %653 = vmatprep.subr.bf16.mxu0 0
      %654 = vmatpush1.bf16.msra.mxu0 0
      %655 = vmatprep.subr.bf16.mxu0 0
      %656 = vmatpush1.bf16.msra.mxu0 0
      %657 = vmatprep.subr.bf16.mxu0 0
      %658 = vmatpush1.bf16.msra.mxu0 0
      %659 = vmatprep.subr.bf16.mxu0 0
      %660 = vmatpush1.bf16.msra.mxu0 0
      %661 = vmatprep.subr.bf16.mxu0 0
      %662 = vmatpush1.bf16.msra.mxu0 0
      %663 = vmatprep.subr.bf16.mxu0 0
      %664 = vmatpush1.bf16.msra.mxu0 0
      %665 = vmatprep.subr.bf16.mxu0 0
      %666 = vmatpush1.bf16.msra.mxu0 0
      %667 = vmatprep.subr.bf16.mxu0 0
      %668 = vmatpush1.bf16.msra.mxu0 0
      %669 = vmatprep.subr.bf16.mxu0 0
      %670 = vmatpush1.bf16.msra.mxu0 0
      %671 = vmatprep.subr.bf16.mxu0 0
      %672 = vmatpush1.bf16.msra.mxu0 0
      %673 = vmatprep.subr.bf16.mxu0 0
      %674 = vmatpush1.bf16.msra.mxu0 0
      %675 = vmatprep.subr.bf16.mxu0 0
      %676 = vmatpush1.bf16.msra.mxu0 0
      %677 = vmatprep.subr.bf16.mxu0 0
      %678 = vmatpush1.bf16.msra.mxu0 0
      %679 = vmatprep.mubr.bf16.mxu0 0
      %680 = vmatmul.mubr.bf16.gmra.mrb[0].mxu0 %v587
      %v681 = vpop.f32.mrb[0].mxu0
      %v682 = vadd.f32 %v637, %v681
      %v683 = vpop.f32.mrb[0].mxu0
      %v684 = vpop.f32.mrb[0].mxu0
      %v685 = vadd.f32 %v638, %v684
      %v686 = vpop.f32.mrb[0].mxu0
      %687 = vdwg.mxu0
      %688 = vst.msk [vmem:[%s630 + $0x10] sm:$0xff] %vm459, %v682
      %689 = vst.msk [vmem:[%s630 + $0x18] sm:$0xff] %vm459, %v685
      %v690 = vld [vmem:[%s565 + $0x10] sm:$0xf]
      %v691 = vld [vmem:[%s565 + $0x14] sm:$0xf]
      %v692 = vunpack.c.l.bf16 %v690
      %v693 = vunpack.c.l.bf16 %v691
      %v694 = vmul.f32 %v570, %v692
      %v695 = vmul.f32 %v570, %v693
      %698 = vrot.lane.b32.xlu0 %v397, 112
      %v699 = vpop.permute.xlu0 %698
      %700 = vrot.lane.b32.xlu0 %v398, 112
      %v701 = vpop.permute.xlu0 %700
      %704 = vmatprep.subr.bf16.mxu0 0
      %705 = vmatpush1.bf16.msra.mxu0 %v699
      %706 = vmatprep.subr.bf16.mxu0 0
      %707 = vmatpush1.bf16.msra.mxu0 %v701
      %708 = vmatprep.subr.bf16.mxu0 0
      %709 = vmatpush1.bf16.msra.mxu0 0
      %710 = vmatprep.subr.bf16.mxu0 0
      %711 = vmatpush1.bf16.msra.mxu0 0
      %712 = vmatprep.subr.bf16.mxu0 0
      %713 = vmatpush1.bf16.msra.mxu0 0
      %714 = vmatprep.subr.bf16.mxu0 0
      %715 = vmatpush1.bf16.msra.mxu0 0
      %716 = vmatprep.subr.bf16.mxu0 0
      %717 = vmatpush1.bf16.msra.mxu0 0
      %718 = vmatprep.subr.bf16.mxu0 0
      %719 = vmatpush1.bf16.msra.mxu0 0
      %720 = vmatprep.subr.bf16.mxu0 0
      %721 = vmatpush1.bf16.msra.mxu0 0
      %722 = vmatprep.subr.bf16.mxu0 0
      %723 = vmatpush1.bf16.msra.mxu0 0
      %724 = vmatprep.subr.bf16.mxu0 0
      %725 = vmatpush1.bf16.msra.mxu0 0
      %726 = vmatprep.subr.bf16.mxu0 0
      %727 = vmatpush1.bf16.msra.mxu0 0
      %728 = vmatprep.subr.bf16.mxu0 0
      %729 = vmatpush1.bf16.msra.mxu0 0
      %730 = vmatprep.subr.bf16.mxu0 0
      %731 = vmatpush1.bf16.msra.mxu0 0
      %732 = vmatprep.subr.bf16.mxu0 0
      %733 = vmatpush1.bf16.msra.mxu0 0
      %734 = vmatprep.subr.bf16.mxu0 0
      %735 = vmatpush1.bf16.msra.mxu0 0
      %736 = vmatprep.mubr.bf16.mxu0 0
      %737 = vmatmul.mubr.bf16.gmra.mrb[0].mxu0 %v587
      %v738 = vpop.f32.mrb[0].mxu0
      %v739 = vadd.f32 %v694, %v738
      %v740 = vpop.f32.mrb[0].mxu0
      %v741 = vpop.f32.mrb[0].mxu0
      %v742 = vadd.f32 %v695, %v741
      %v743 = vpop.f32.mrb[0].mxu0
      %744 = vdwg.mxu0
      %745 = vst.msk [vmem:[%s630 + $0x20] sm:$0xff] %vm459, %v739
      %746 = vst.msk [vmem:[%s630 + $0x28] sm:$0xff] %vm459, %v742
      %s747 = smul.u32 2, %s22
      %p748 = scmp.lt.s32.totalorder %s747, 3
      %s749 = scalar_select %p748, %s747, 3
      %s750 = smul.addr %s749, 6
      %s751 = smul.addr %s750, 8
      %s752 = scalar_lea.vmem %s5, %s751
      // Predicated region
      $region37: #{tpu_custom_call.1} parent=35 // pred_check
        %p753 = pneg %p139
      $region38: #{tpu_custom_call.1} parent=35 // pred_check_branch
        %755 = sbr.rel (%p753) target = $region40
      $region39: #{tpu_custom_call.1} parent=35 // pred_region
        %s756 = smul.u32 2, %s22
      $region40: #{tpu_custom_call.1} parent=35 // pred_fallthru
        _
    $region36: #{tpu_custom_call.1} parent=5 // pred_fallthru
      _
    %p757 = scmp.le.s32.totalorder 2, %s17
    // Predicated region
    $region41: #{tpu_custom_call.1} parent=5 // pred_check
      %p758 = pneg %p757
    $region42: #{tpu_custom_call.1} parent=5 // pred_check_branch
      %760 = sbr.rel (%p758) target = $region44
    $region43: #{tpu_custom_call.1} parent=5 // pred_region
      %s761 = ssub.s32 %s17, 2
      // Predicated region
      $region45: #{tpu_custom_call.1} parent=43 // pred_check
        %p762 = pneg %p145
      $region46: #{tpu_custom_call.1} parent=43 // pred_check_branch
        %764 = sbr.rel (%p762) target = $region48
      $region47: #{tpu_custom_call.1} parent=43 // pred_region
        %s765 = smul.u32 2, %s23
        %p766 = scmp.lt.s32.totalorder %s765, 3
        %s767 = scalar_select %p766, %s765, 3
        %s768 = smul.addr %s767, 6
        %s769 = smul.addr %s768, 8
        %s770 = scalar_lea.vmem %s5, %s769
      $region48: #{tpu_custom_call.1} parent=43 // pred_fallthru
        _
    $region44: #{tpu_custom_call.1} parent=5 // pred_fallthru
      _
  $region6: #{tpu_custom_call.1} parent=0 // loop_footer
    %s21 = sadd.s32 1, %s17
  $region7: #{tpu_custom_call.1} parent=0 // loop_footer_branch
    %16 = sbr.rel target = $region3
  $region8: #{tpu_custom_call.1} parent=0 // loop_exit
    _

// kernel: tpu_custom_call.1
$region0: #{tpu_custom_call.1}
  #allocation0 [shape = 'u32[]', space=smem, size = 0x4, offset = 0x4, fixed_abs, tag = 'smem constant byte address 0x4 - core index']
  #allocation1 [shape = 'u32[144,128]{1,0:T(1,128)}', space=vmem, size = 0x12000, scoped, tag = 'internal scratch']
  #allocation2 [shape = 's32[1]{0}', space=sflag, size = 0x4, scoped, tag = 'scoped memory for tpu_custom_call.1']
  #allocation3 [shape = 'u8[512]{0}', space=smem, size = 0x200, scoped, tag = 'prefetched SMEM operand 0']
  %s0 = inlined_call_operand.vmem [shape: f32[4], index: 0, kind: input, shape index: {}]
  %s1 = inlined_call_operand.vmem [shape: f32[96,32], index: 1, kind: input, shape index: {}]
  %s2 = inlined_call_operand.vmem [shape: bf16[4,16,32], index: 2, kind: input, shape index: {}]
  %s3 = inlined_call_operand.vmem [shape: bf16[2,32,32], index: 3, kind: input, shape index: {}]
  %s4 = inlined_call_operand.vmem [shape: bf16[4,48,16], index: 4, kind: input, shape index: {}]
  %s5 = inlined_call_operand.vmem [shape: f32[4,48,16], index: 5, kind: output, shape index: {}]
  %s6 = sld [smem:[#allocation0]]
  $region49: #{tpu_custom_call.1} parent=0
    _
  %s8 = ssub.s32 1, %s6
  %s9 = scalar_select 0, %s8, %s6
  %s10 = sshll.u32 %s0, 4
  %s11 = int_to_ptr.vmem [resolvable:$true] %s10
  %13 = dma.vmem_to_smem %s11, 16, [#allocation3], [#allocation2]
  %14 = dma.done [#allocation2], 16
  %15 = sfence
  loop: start=0, step=1, limit=4
  $region2: #{tpu_custom_call.1} parent=0 // loop_pre_header
    _
  $region3: #{tpu_custom_call.1} parent=0 // loop_header
    %s17 = sphi 0, %s21
    %p18 = scmp.ge.s32.totalorder %s17, 4
    %s25 = sphi 0, %s25
    %s27 = sphi 0, %s25
    %s28 = sphi 0, %s27
    %s42 = sphi 0, %s28
    %s48 = sphi 0, %s50
    %s51 = sphi 0, %s48
    %s52 = sphi 0, %s51
    %s68 = sphi 0, %s52
    %s74 = sphi 0, %s76
    %s77 = sphi 0, %s74
    %s78 = sphi 0, %s77
    %s94 = sphi 0, %s78
    %s100 = sphi 0, %s102
    %s103 = sphi 0, %s100
    %s104 = sphi 0, %s103
    %s120 = sphi 0, %s104
    %s126 = sphi 0, %s128
    %s129 = sphi 0, %s126
    %s130 = sphi 0, %s129
    %s146 = sphi 0, %s130
  $region4: #{tpu_custom_call.1} parent=0 // loop_header_branch
    %20 = sbr.rel (%p18) target = $region8
  $region5: #{tpu_custom_call.1} parent=0 // loop_body
    %s22 = ssub.s32 %s17, 1
    %s23 = ssub.s32 %s17, 2
    %s24 = sadd.s32 %s17, 1
    %s26 = sadd.s32 %s25, 1
    %p29 = scmp.eq.s32.totalorder %s17, 1
    %p30 = scmp.ne.s32.totalorder %s25, %s27
    %p31 = scmp.eq.s32.totalorder %s17, 0
    %p32 = por %p30, %p31
    %p33 = scmp.ne.s32.totalorder %s25, %s27
    %p34 = scmp.eq.s32.totalorder %s22, 1
    %p35 = por %p33, %p34
    %p36 = scmp.ne.s32.totalorder %s27, %s28
    %p37 = scmp.eq.s32.totalorder %s22, 0
    %p38 = por %p36, %p37
    %p39 = scmp.ne.s32.totalorder %s27, %s28
    %p40 = scmp.eq.s32.totalorder %s23, 1
    %p41 = por %p39, %p40
    %p43 = scmp.ne.s32.totalorder %s28, %s42
    %p44 = scmp.eq.s32.totalorder %s23, 0
    %p45 = por %p43, %p44
    %s46 = ssub.s32 %s17, %s24
    %p47 = scmp.eq.s32.totalorder %s46, 0
    %s49 = sadd.s32 %s48, 1
    %s50 = scalar_select %p47, %s48, %s49
    %p53 = pneg %p47
    %p54 = scmp.eq.s32.totalorder %s17, 1
    %p55 = por %p53, %p54
    %p56 = scmp.ne.s32.totalorder %s48, %s51
    %p57 = scmp.eq.s32.totalorder %s17, 0
    %p58 = por %p56, %p57
    %p59 = scmp.ne.s32.totalorder %s48, %s51
    %p60 = scmp.eq.s32.totalorder %s22, 1
    %p61 = por %p59, %p60
    %p62 = scmp.ne.s32.totalorder %s51, %s52
    %p63 = scmp.eq.s32.totalorder %s22, 0
    %p64 = por %p62, %p63
    %p65 = scmp.ne.s32.totalorder %s51, %s52
    %p66 = scmp.eq.s32.totalorder %s23, 1
    %p67 = por %p65, %p66
    %p69 = scmp.ne.s32.totalorder %s52, %s68
    %p70 = scmp.eq.s32.totalorder %s23, 0
    %p71 = por %p69, %p70
    %s72 = ssub.s32 %s17, %s24
    %p73 = scmp.eq.s32.totalorder %s72, 0
    %s75 = sadd.s32 %s74, 1
    %s76 = scalar_select %p73, %s74, %s75
    %p79 = pneg %p73
    %p80 = scmp.eq.s32.totalorder %s17, 1
    %p81 = por %p79, %p80
    %p82 = scmp.ne.s32.totalorder %s74, %s77
    %p83 = scmp.eq.s32.totalorder %s17, 0
    %p84 = por %p82, %p83
    %p85 = scmp.ne.s32.totalorder %s74, %s77
    %p86 = scmp.eq.s32.totalorder %s22, 1
    %p87 = por %p85, %p86
    %p88 = scmp.ne.s32.totalorder %s77, %s78
    %p89 = scmp.eq.s32.totalorder %s22, 0
    %p90 = por %p88, %p89
    %p91 = scmp.ne.s32.totalorder %s77, %s78
    %p92 = scmp.eq.s32.totalorder %s23, 1
    %p93 = por %p91, %p92
    %p95 = scmp.ne.s32.totalorder %s78, %s94
    %p96 = scmp.eq.s32.totalorder %s23, 0
    %p97 = por %p95, %p96
    %s98 = ssub.s32 %s17, %s24
    %p99 = scmp.eq.s32.totalorder %s98, 0
    %s101 = sadd.s32 %s100, 1
    %s102 = scalar_select %p99, %s100, %s101
    %p105 = pneg %p99
    %p106 = scmp.eq.s32.totalorder %s17, 1
    %p107 = por %p105, %p106
    %p108 = scmp.ne.s32.totalorder %s100, %s103
    %p109 = scmp.eq.s32.totalorder %s17, 0
    %p110 = por %p108, %p109
    %p111 = scmp.ne.s32.totalorder %s100, %s103
    %p112 = scmp.eq.s32.totalorder %s22, 1
    %p113 = por %p111, %p112
    %p114 = scmp.ne.s32.totalorder %s103, %s104
    %p115 = scmp.eq.s32.totalorder %s22, 0
    %p116 = por %p114, %p115
    %p117 = scmp.ne.s32.totalorder %s103, %s104
    %p118 = scmp.eq.s32.totalorder %s23, 1
    %p119 = por %p117, %p118
    %p121 = scmp.ne.s32.totalorder %s104, %s120
    %p122 = scmp.eq.s32.totalorder %s23, 0
    %p123 = por %p121, %p122
    %s124 = ssub.s32 %s17, %s24
    %p125 = scmp.eq.s32.totalorder %s124, 0
    %s127 = sadd.s32 %s126, 1
    %s128 = scalar_select %p125, %s126, %s127
    %p131 = pneg %p125
    %p132 = scmp.eq.s32.totalorder %s17, 1
    %p133 = por %p131, %p132
    %p134 = scmp.ne.s32.totalorder %s126, %s129
    %p135 = scmp.eq.s32.totalorder %s17, 0
    %p136 = por %p134, %p135
    %p137 = scmp.ne.s32.totalorder %s126, %s129
    %p138 = scmp.eq.s32.totalorder %s22, 1
    %p139 = por %p137, %p138
    %p140 = scmp.ne.s32.totalorder %s129, %s130
    %p141 = scmp.eq.s32.totalorder %s22, 0
    %p142 = por %p140, %p141
    %p143 = scmp.ne.s32.totalorder %s129, %s130
    %p144 = scmp.eq.s32.totalorder %s23, 1
    %p145 = por %p143, %p144
    %p147 = scmp.ne.s32.totalorder %s130, %s146
    %p148 = scmp.eq.s32.totalorder %s23, 0
    %p149 = por %p147, %p148
    %p150 = scmp.le.s32.totalorder 1, %s17
    %p151 = scmp.lt.s32.totalorder %s17, 3
    %p152 = pnand %p150, %p151
    %p153 = pneg %p152
    // Predicated region
    $region9: #{tpu_custom_call.1} parent=5 // pred_check
      _
    $region10: #{tpu_custom_call.1} parent=5 // pred_check_branch
      %155 = sbr.rel (%p152) target = $region12
    $region11: #{tpu_custom_call.1} parent=5 // pred_region
      %s156 = ssub.s32 %s17, 1
      // Predicated region
      $region13: #{tpu_custom_call.1} parent=11 // pred_check
        %p157 = pneg %p38
      $region14: #{tpu_custom_call.1} parent=11 // pred_check_branch
        %159 = sbr.rel (%p157) target = $region16
      $region15: #{tpu_custom_call.1} parent=11 // pred_region
        _
      $region16: #{tpu_custom_call.1} parent=11 // pred_fallthru
        _
    $region12: #{tpu_custom_call.1} parent=5 // pred_fallthru
      _
    %p160 = scmp.lt.s32.totalorder %s17, 2
    // Predicated region
    $region17: #{tpu_custom_call.1} parent=5 // pred_check
      %p161 = pneg %p160
    $region18: #{tpu_custom_call.1} parent=5 // pred_check_branch
      %163 = sbr.rel (%p161) target = $region20
    $region19: #{tpu_custom_call.1} parent=5 // pred_region
      // Predicated region
      $region21: #{tpu_custom_call.1} parent=19 // pred_check
        %p164 = pneg %p58
      $region22: #{tpu_custom_call.1} parent=19 // pred_check_branch
        %166 = sbr.rel (%p164) target = $region24
      $region23: #{tpu_custom_call.1} parent=19 // pred_region
        %s167 = smul.u32 2, %s17
        %p168 = scmp.lt.s32.totalorder %s167, 3
        %s169 = scalar_select %p168, %s167, 3
        %s170 = smul.addr %s169, 2
        %s171 = smul.addr %s170, 4
        %s172 = scalar_lea.vmem %s2, %s171
        %s173 = smul.u32 2, %s17
      $region24: #{tpu_custom_call.1} parent=19 // pred_fallthru
        _
      // Predicated region
      $region25: #{tpu_custom_call.1} parent=19 // pred_check
        %p174 = pneg %p84
      $region26: #{tpu_custom_call.1} parent=19 // pred_check_branch
        %176 = sbr.rel (%p174) target = $region28
      $region27: #{tpu_custom_call.1} parent=19 // pred_region
        %p177 = scmp.lt.s32.totalorder %s17, 1
        %s178 = scalar_select %p177, %s17, 1
        %s179 = smul.addr %s178, 4
        %s180 = smul.addr %s179, 4
        %s181 = scalar_lea.vmem %s3, %s180
      $region28: #{tpu_custom_call.1} parent=19 // pred_fallthru
        _
      // Predicated region
      $region29: #{tpu_custom_call.1} parent=19 // pred_check
        %p182 = pneg %p110
      $region30: #{tpu_custom_call.1} parent=19 // pred_check_branch
        %184 = sbr.rel (%p182) target = $region32
      $region31: #{tpu_custom_call.1} parent=19 // pred_region
        %s185 = smul.u32 2, %s17
        %p186 = scmp.lt.s32.totalorder %s185, 3
        %s187 = scalar_select %p186, %s185, 3
        %s188 = smul.addr %s187, 6
        %s189 = smul.addr %s188, 4
        %s190 = scalar_lea.vmem %s4, %s189
        %s191 = smul.u32 2, %s17
      $region32: #{tpu_custom_call.1} parent=19 // pred_fallthru
        _
    $region20: #{tpu_custom_call.1} parent=5 // pred_fallthru
      _
    %p192 = scmp.le.s32.totalorder 1, %s17
    %p193 = scmp.lt.s32.totalorder %s17, 3
    %p194 = pnand %p192, %p193
    %p195 = pneg %p194
    // Predicated region
    $region33: #{tpu_custom_call.1} parent=5 // pred_check
      _
    $region34: #{tpu_custom_call.1} parent=5 // pred_check_branch
      %197 = sbr.rel (%p194) target = $region36
    $region35: #{tpu_custom_call.1} parent=5 // pred_region
      %s198 = ssub.s32 %s17, 1
      %p199 = pneg %p38
      %p200 = pneg %p35
      %s201 = smul.u32 2, %s22
      %p202 = scmp.lt.s32.totalorder %s201, 3
      %s203 = scalar_select %p202, %s201, 3
      %s204 = smul.addr %s203, 2
      %s205 = smul.addr %s204, 4
      %s206 = scalar_lea.vmem %s2, %s205
      %p207 = pneg %p64
      %p208 = pneg %p61
      %p209 = scmp.lt.s32.totalorder %s22, 1
      %s210 = scalar_select %p209, %s22, 1
      %s211 = smul.addr %s210, 4
      %s212 = smul.addr %s211, 4
      %s213 = scalar_lea.vmem %s3, %s212
      %p214 = pneg %p90
      %p215 = pneg %p87
      %s216 = smul.u32 2, %s22
      %p217 = scmp.lt.s32.totalorder %s216, 3
      %s218 = scalar_select %p217, %s216, 3
      %s219 = smul.addr %s218, 6
      %s220 = smul.addr %s219, 4
      %s221 = scalar_lea.vmem %s4, %s220
      %p222 = pneg %p116
      %p223 = pneg %p113
      %p224 = pneg %p142
      %p225 = pneg %p139
      %s226 = smul.u32 2, %s22
      %p227 = scmp.lt.s32.totalorder %s226, 3
      %s228 = scalar_select %p227, %s226, 3
      %s229 = smul.addr %s228, 6
      %s230 = smul.addr %s229, 8
      %s231 = scalar_lea.vmem %s5, %s230
      %s232 = smul.u32 2, %s22
      %p233 = scmp.lt.s32.totalorder %s232, 3
      %s234 = scalar_select %p233, %s232, 3
      %s235 = smul.addr %s234, 2
      %s236 = smul.addr %s235, 4
      %s237 = scalar_lea.vmem %s2, %s236
      %s238 = smul.u32 2, %s22
      %p239 = scmp.lt.s32.totalorder %s22, 1
      %s240 = scalar_select %p239, %s22, 1
      %s241 = smul.addr %s240, 4
      %s242 = smul.addr %s241, 4
      %s243 = scalar_lea.vmem %s3, %s242
      %s244 = smul.u32 2, %s22
      %p245 = scmp.lt.s32.totalorder %s244, 3
      %s246 = scalar_select %p245, %s244, 3
      %s247 = smul.addr %s246, 6
      %s248 = smul.addr %s247, 4
      %s249 = scalar_lea.vmem %s4, %s248
      %s250 = smul.u32 2, %s22
      %s251 = smul.u32 2, %s22
      %p252 = scmp.lt.s32.totalorder %s251, 3
      %s253 = scalar_select %p252, %s251, 3
      %s254 = smul.addr %s253, 6
      %s255 = smul.addr %s254, 8
      %s256 = scalar_lea.vmem %s5, %s255
      %s257 = smul.u32 2, %s22
      %v259 = vld [vmem:[%s1] sm:$0xff]
      %v260 = vld [vmem:[%s1 + $0x8] sm:$0xff]
      %v261 = vld [vmem:[%s1 + $0x10] sm:$0xff]
      %v262 = vld [vmem:[%s1 + $0x18] sm:$0xff]
      %v263 = vld [vmem:[%s1 + $0x20] sm:$0xff]
      %v264 = vld [vmem:[%s1 + $0x28] sm:$0xff]
      %v265 = vld [vmem:[%s1 + $0x30] sm:$0xff]
      %v266 = vld [vmem:[%s1 + $0x38] sm:$0xff]
      %v267 = vld [vmem:[%s1 + $0x40] sm:$0xff]
      %v268 = vld [vmem:[%s1 + $0x48] sm:$0xff]
      %v269 = vld [vmem:[%s1 + $0x50] sm:$0xff]
      %v270 = vld [vmem:[%s1 + $0x58] sm:$0xff]
      %v271 = vpack.c.bf16 %v260, %v259
      %v272 = vpack.c.bf16 %v262, %v261
      %v273 = vpack.c.bf16 %v264, %v263
      %v274 = vpack.c.bf16 %v266, %v265
      %v275 = vpack.c.bf16 %v268, %v267
      %v276 = vpack.c.bf16 %v270, %v269
      %v277 = vld [vmem:[%s243] sm:$0xf]
      %v278 = vld [vmem:[%s243 + $0x4] sm:$0xf]
      %v279 = vld [vmem:[%s243 + $0x8] sm:$0xf]
      %v280 = vld [vmem:[%s243 + $0xc] sm:$0xf]
      %v285 = vunpack.c.l.b16 %v277
      %v286 = vunpack.c.l.b16 %v278
      %v287 = vunpack.c.l.b16 %v279
      %v288 = vunpack.c.l.b16 %v280
      %v289 = vpack.c.b16 %v286, %v285
      %v290 = vpack.c.b16 %v288, %v287
      %vm293 = vcmask 261120
      %v295 = vsel %vm293, %v271, 0
      %v298 = vsel %vm293, %v272, 0
      %v301 = vsel %vm293, %v273, 0
      %v304 = vsel %vm293, %v274, 0
      %v307 = vsel %vm293, %v275, 0
      %v310 = vsel %vm293, %v276, 0
      %312 = vmatprep.subr.bf16.mxu0 0
      %313 = vmatpush1.bf16.msra.mxu0 %v289
      %314 = vmatprep.subr.bf16.mxu0 0
      %315 = vmatpush1.bf16.msra.mxu0 %v290
      %316 = vmatprep.subr.bf16.mxu0 0
      %317 = vmatpush1.bf16.msra.mxu0 0
      %318 = vmatprep.subr.bf16.mxu0 0
      %319 = vmatpush1.bf16.msra.mxu0 0
      %320 = vmatprep.subr.bf16.mxu0 0
      %321 = vmatpush1.bf16.msra.mxu0 0
      %322 = vmatprep.subr.bf16.mxu0 0
      %323 = vmatpush1.bf16.msra.mxu0 0
      %324 = vmatprep.subr.bf16.mxu0 0
      %325 = vmatpush1.bf16.msra.mxu0 0
      %326 = vmatprep.subr.bf16.mxu0 0
      %327 = vmatpush1.bf16.msra.mxu0 0
      %328 = vmatprep.subr.bf16.mxu0 0
      %329 = vmatpush1.bf16.msra.mxu0 0
      %330 = vmatprep.subr.bf16.mxu0 0
      %331 = vmatpush1.bf16.msra.mxu0 0
      %332 = vmatprep.subr.bf16.mxu0 0
      %333 = vmatpush1.bf16.msra.mxu0 0
      %334 = vmatprep.subr.bf16.mxu0 0
      %335 = vmatpush1.bf16.msra.mxu0 0
      %336 = vmatprep.subr.bf16.mxu0 0
      %337 = vmatpush1.bf16.msra.mxu0 0
      %338 = vmatprep.subr.bf16.mxu0 0
      %339 = vmatpush1.bf16.msra.mxu0 0
      %340 = vmatprep.subr.bf16.mxu0 0
      %341 = vmatpush1.bf16.msra.mxu0 0
      %342 = vmatprep.subr.bf16.mxu0 0
      %343 = vmatpush1.bf16.msra.mxu0 0
      %344 = vmatprep.mubr.bf16.mxu0 0
      %345 = vmatmul.mubr.bf16.gmra.mrb[0].mxu0 %v295
      %v346 = vpop.f32.mrb[0].mxu0
      %v347 = vadd.f32 0.0, %v346
      %v348 = vpop.f32.mrb[0].mxu0
      %v349 = vpop.f32.mrb[0].mxu0
      %v350 = vadd.f32 0.0, %v349
      %v351 = vpop.f32.mrb[0].mxu0
      %352 = vmatprep.mubr.bf16.mxu0 0
      %353 = vmatmul.mubr.bf16.gmra.mrb[0].mxu0 %v298
      %v354 = vpop.f32.mrb[0].mxu0
      %v355 = vadd.f32 0.0, %v354
      %v356 = vpop.f32.mrb[0].mxu0
      %v357 = vpop.f32.mrb[0].mxu0
      %v358 = vadd.f32 0.0, %v357
      %v359 = vpop.f32.mrb[0].mxu0
      %360 = vmatprep.mubr.bf16.mxu0 0
      %361 = vmatmul.mubr.bf16.gmra.mrb[0].mxu0 %v301
      %v362 = vpop.f32.mrb[0].mxu0
      %v363 = vadd.f32 0.0, %v362
      %v364 = vpop.f32.mrb[0].mxu0
      %v365 = vpop.f32.mrb[0].mxu0
      %v366 = vadd.f32 0.0, %v365
      %v367 = vpop.f32.mrb[0].mxu0
      %368 = vmatprep.mubr.bf16.mxu0 0
      %369 = vmatmul.mubr.bf16.gmra.mrb[0].mxu0 %v304
      %v370 = vpop.f32.mrb[0].mxu0
      %v371 = vadd.f32 0.0, %v370
      %v372 = vpop.f32.mrb[0].mxu0
      %v373 = vpop.f32.mrb[0].mxu0
      %v374 = vadd.f32 0.0, %v373
      %v375 = vpop.f32.mrb[0].mxu0
      %376 = vmatprep.mubr.bf16.mxu0 0
      %377 = vmatmul.mubr.bf16.gmra.mrb[0].mxu0 %v307
      %v378 = vpop.f32.mrb[0].mxu0
      %v379 = vadd.f32 0.0, %v378
      %v380 = vpop.f32.mrb[0].mxu0
      %v381 = vpop.f32.mrb[0].mxu0
      %v382 = vadd.f32 0.0, %v381
      %v383 = vpop.f32.mrb[0].mxu0
      %384 = vmatprep.mubr.bf16.mxu0 0
      %385 = vmatmul.mubr.bf16.gmra.mrb[0].mxu0 %v310
      %v386 = vpop.f32.mrb[0].mxu0
      %v387 = vadd.f32 0.0, %v386
      %v388 = vpop.f32.mrb[0].mxu0
      %v389 = vpop.f32.mrb[0].mxu0
      %v390 = vadd.f32 0.0, %v389
      %v391 = vpop.f32.mrb[0].mxu0
      %392 = vdwg.mxu0
      %v393 = vpack.c.bf16 %v350, %v347
      %v394 = vpack.c.bf16 %v358, %v355
      %v395 = vpack.c.bf16 %v366, %v363
      %v396 = vpack.c.bf16 %v374, %v371
      %v397 = vpack.c.bf16 %v382, %v379
      %v398 = vpack.c.bf16 %v390, %v387
      %v399 = vld [vmem:[%s237] sm:$0xf]
      %v400 = vld [vmem:[%s237 + $0x4] sm:$0xf]
      %s401 = smul.u32 %s22, 2
      %s402 = sld [smem:[#allocation3 + %s401]]
      %v403 = vld [vmem:[%s249] sm:$0xf]
      %v404 = vld [vmem:[%s249 + $0x4] sm:$0xf]
      %v405 = vunpack.c.l.bf16 %v403
      %v406 = vunpack.c.l.bf16 %v404
      %v407 = vstv %s402
      %v408 = vmul.f32 %v407, %v405
      %v409 = vmul.f32 %v407, %v406
      %v412 = vunpack.c.l.b16 %v399
      %v413 = vunpack.c.l.b16 %v400
      %v414 = vpack.c.b16 %v413, %v412
      %v416 = vsel %vm293, %v414, 0
      %418 = vmatprep.subr.bf16.mxu0 0
      %419 = vmatpush1.bf16.msra.mxu0 %v393
      %420 = vmatprep.subr.bf16.mxu0 0
      %421 = vmatpush1.bf16.msra.mxu0 %v394
      %422 = vmatprep.subr.bf16.mxu0 0
      %423 = vmatpush1.bf16.msra.mxu0 0
      %424 = vmatprep.subr.bf16.mxu0 0
      %425 = vmatpush1.bf16.msra.mxu0 0
      %426 = vmatprep.subr.bf16.mxu0 0
      %427 = vmatpush1.bf16.msra.mxu0 0
      %428 = vmatprep.subr.bf16.mxu0 0
      %429 = vmatpush1.bf16.msra.mxu0 0
      %430 = vmatprep.subr.bf16.mxu0 0
      %431 = vmatpush1.bf16.msra.mxu0 0
      %432 = vmatprep.subr.bf16.mxu0 0
      %433 = vmatpush1.bf16.msra.mxu0 0
      %434 = vmatprep.subr.bf16.mxu0 0
      %435 = vmatpush1.bf16.msra.mxu0 0
      %436 = vmatprep.subr.bf16.mxu0 0
      %437 = vmatpush1.bf16.msra.mxu0 0
      %438 = vmatprep.subr.bf16.mxu0 0
      %439 = vmatpush1.bf16.msra.mxu0 0
      %440 = vmatprep.subr.bf16.mxu0 0
      %441 = vmatpush1.bf16.msra.mxu0 0
      %442 = vmatprep.subr.bf16.mxu0 0
      %443 = vmatpush1.bf16.msra.mxu0 0
      %444 = vmatprep.subr.bf16.mxu0 0
      %445 = vmatpush1.bf16.msra.mxu0 0
      %446 = vmatprep.subr.bf16.mxu0 0
      %447 = vmatpush1.bf16.msra.mxu0 0
      %448 = vmatprep.subr.bf16.mxu0 0
      %449 = vmatpush1.bf16.msra.mxu0 0
      %450 = vmatprep.mubr.bf16.mxu0 0
      %451 = vmatmul.mubr.bf16.gmra.mrb[0].mxu0 %v416
      %v452 = vpop.f32.mrb[0].mxu0
      %v453 = vadd.f32 %v408, %v452
      %v454 = vpop.f32.mrb[0].mxu0
      %v455 = vpop.f32.mrb[0].mxu0
      %v456 = vadd.f32 %v409, %v455
      %v457 = vpop.f32.mrb[0].mxu0
      %458 = vdwg.mxu0
      %vm459 = vcmask 130048
      %460 = vst.msk [vmem:[%s256] sm:$0xff] %vm459, %v453
      %461 = vst.msk [vmem:[%s256 + $0x8] sm:$0xff] %vm459, %v456
      %v462 = vld [vmem:[%s249 + $0x8] sm:$0xf]
      %v463 = vld [vmem:[%s249 + $0xc] sm:$0xf]
      %v464 = vunpack.c.l.bf16 %v462
      %v465 = vunpack.c.l.bf16 %v463
      %v466 = vmul.f32 %v407, %v464
      %v467 = vmul.f32 %v407, %v465
      %468 = vmatprep.subr.bf16.mxu0 0
      %469 = vmatpush1.bf16.msra.mxu0 %v395
      %470 = vmatprep.subr.bf16.mxu0 0
      %471 = vmatpush1.bf16.msra.mxu0 %v396
      %472 = vmatprep.subr.bf16.mxu0 0
      %473 = vmatpush1.bf16.msra.mxu0 0
      %474 = vmatprep.subr.bf16.mxu0 0
      %475 = vmatpush1.bf16.msra.mxu0 0
      %476 = vmatprep.subr.bf16.mxu0 0
      %477 = vmatpush1.bf16.msra.mxu0 0
      %478 = vmatprep.subr.bf16.mxu0 0
      %479 = vmatpush1.bf16.msra.mxu0 0
      %480 = vmatprep.subr.bf16.mxu0 0
      %481 = vmatpush1.bf16.msra.mxu0 0
      %482 = vmatprep.subr.bf16.mxu0 0
      %483 = vmatpush1.bf16.msra.mxu0 0
      %484 = vmatprep.subr.bf16.mxu0 0
      %485 = vmatpush1.bf16.msra.mxu0 0
      %486 = vmatprep.subr.bf16.mxu0 0
      %487 = vmatpush1.bf16.msra.mxu0 0
      %488 = vmatprep.subr.bf16.mxu0 0
      %489 = vmatpush1.bf16.msra.mxu0 0
      %490 = vmatprep.subr.bf16.mxu0 0
      %491 = vmatpush1.bf16.msra.mxu0 0
      %492 = vmatprep.subr.bf16.mxu0 0
      %493 = vmatpush1.bf16.msra.mxu0 0
      %494 = vmatprep.subr.bf16.mxu0 0
      %495 = vmatpush1.bf16.msra.mxu0 0
      %496 = vmatprep.subr.bf16.mxu0 0
      %497 = vmatpush1.bf16.msra.mxu0 0
      %498 = vmatprep.subr.bf16.mxu0 0
      %499 = vmatpush1.bf16.msra.mxu0 0
      %500 = vmatprep.mubr.bf16.mxu0 0
      %501 = vmatmul.mubr.bf16.gmra.mrb[0].mxu0 %v416
      %v502 = vpop.f32.mrb[0].mxu0
      %v503 = vadd.f32 %v466, %v502
      %v504 = vpop.f32.mrb[0].mxu0
      %v505 = vpop.f32.mrb[0].mxu0
      %v506 = vadd.f32 %v467, %v505
      %v507 = vpop.f32.mrb[0].mxu0
      %508 = vdwg.mxu0
      %509 = vst.msk [vmem:[%s256 + $0x10] sm:$0xff] %vm459, %v503
      %510 = vst.msk [vmem:[%s256 + $0x18] sm:$0xff] %vm459, %v506
      %v511 = vld [vmem:[%s249 + $0x10] sm:$0xf]
      %v512 = vld [vmem:[%s249 + $0x14] sm:$0xf]
      %v513 = vunpack.c.l.bf16 %v511
      %v514 = vunpack.c.l.bf16 %v512
      %v515 = vmul.f32 %v407, %v513
      %v516 = vmul.f32 %v407, %v514
      %517 = vmatprep.subr.bf16.mxu0 0
      %518 = vmatpush1.bf16.msra.mxu0 %v397
      %519 = vmatprep.subr.bf16.mxu0 0
      %520 = vmatpush1.bf16.msra.mxu0 %v398
      %521 = vmatprep.subr.bf16.mxu0 0
      %522 = vmatpush1.bf16.msra.mxu0 0
      %523 = vmatprep.subr.bf16.mxu0 0
      %524 = vmatpush1.bf16.msra.mxu0 0
      %525 = vmatprep.subr.bf16.mxu0 0
      %526 = vmatpush1.bf16.msra.mxu0 0
      %527 = vmatprep.subr.bf16.mxu0 0
      %528 = vmatpush1.bf16.msra.mxu0 0
      %529 = vmatprep.subr.bf16.mxu0 0
      %530 = vmatpush1.bf16.msra.mxu0 0
      %531 = vmatprep.subr.bf16.mxu0 0
      %532 = vmatpush1.bf16.msra.mxu0 0
      %533 = vmatprep.subr.bf16.mxu0 0
      %534 = vmatpush1.bf16.msra.mxu0 0
      %535 = vmatprep.subr.bf16.mxu0 0
      %536 = vmatpush1.bf16.msra.mxu0 0
      %537 = vmatprep.subr.bf16.mxu0 0
      %538 = vmatpush1.bf16.msra.mxu0 0
      %539 = vmatprep.subr.bf16.mxu0 0
      %540 = vmatpush1.bf16.msra.mxu0 0
      %541 = vmatprep.subr.bf16.mxu0 0
      %542 = vmatpush1.bf16.msra.mxu0 0
      %543 = vmatprep.subr.bf16.mxu0 0
      %544 = vmatpush1.bf16.msra.mxu0 0
      %545 = vmatprep.subr.bf16.mxu0 0
      %546 = vmatpush1.bf16.msra.mxu0 0
      %547 = vmatprep.subr.bf16.mxu0 0
      %548 = vmatpush1.bf16.msra.mxu0 0
      %549 = vmatprep.mubr.bf16.mxu0 0
      %550 = vmatmul.mubr.bf16.gmra.mrb[0].mxu0 %v416
      %v551 = vpop.f32.mrb[0].mxu0
      %v552 = vadd.f32 %v515, %v551
      %v553 = vpop.f32.mrb[0].mxu0
      %v554 = vpop.f32.mrb[0].mxu0
      %v555 = vadd.f32 %v516, %v554
      %v556 = vpop.f32.mrb[0].mxu0
      %557 = vdwg.mxu0
      %558 = vst.msk [vmem:[%s256 + $0x20] sm:$0xff] %vm459, %v552
      %559 = vst.msk [vmem:[%s256 + $0x28] sm:$0xff] %vm459, %v555
      %s560 = scalar_lea.vmem %s237, 8
      %v561 = vld [vmem:[%s560] sm:$0xf]
      %v562 = vld [vmem:[%s560 + $0x4] sm:$0xf]
      %s563 = sadd.s32 %s401, 1
      %s564 = sld [smem:[#allocation3 + %s563]]
      %s565 = scalar_lea.vmem %s249, 24
      %v566 = vld [vmem:[%s565] sm:$0xf]
      %v567 = vld [vmem:[%s565 + $0x4] sm:$0xf]
      %v568 = vunpack.c.l.bf16 %v566
      %v569 = vunpack.c.l.bf16 %v567
      %v570 = vstv %s564
      %v571 = vmul.f32 %v570, %v568
      %v572 = vmul.f32 %v570, %v569
      %v575 = vunpack.c.l.b16 %v561
      %v576 = vunpack.c.l.b16 %v562
      %v577 = vpack.c.b16 %v576, %v575
      %580 = vrot.lane.b32.xlu0 %v393, 112
      %v581 = vpop.permute.xlu0 %580
      %582 = vrot.lane.b32.xlu0 %v394, 112
      %v583 = vpop.permute.xlu0 %582
      %v587 = vsel %vm293, %v577, 0
      %589 = vmatprep.subr.bf16.mxu0 0
      %590 = vmatpush1.bf16.msra.mxu0 %v581
      %591 = vmatprep.subr.bf16.mxu0 0
      %592 = vmatpush1.bf16.msra.mxu0 %v583
      %593 = vmatprep.subr.bf16.mxu0 0
      %594 = vmatpush1.bf16.msra.mxu0 0
      %595 = vmatprep.subr.bf16.mxu0 0
      %596 = vmatpush1.bf16.msra.mxu0 0
      %597 = vmatprep.subr.bf16.mxu0 0
      %598 = vmatpush1.bf16.msra.mxu0 0
      %599 = vmatprep.subr.bf16.mxu0 0
      %600 = vmatpush1.bf16.msra.mxu0 0
      %601 = vmatprep.subr.bf16.mxu0 0
      %602 = vmatpush1.bf16.msra.mxu0 0
      %603 = vmatprep.subr.bf16.mxu0 0
      %604 = vmatpush1.bf16.msra.mxu0 0
      %605 = vmatprep.subr.bf16.mxu0 0
      %606 = vmatpush1.bf16.msra.mxu0 0
      %607 = vmatprep.subr.bf16.mxu0 0
      %608 = vmatpush1.bf16.msra.mxu0 0
      %609 = vmatprep.subr.bf16.mxu0 0
      %610 = vmatpush1.bf16.msra.mxu0 0
      %611 = vmatprep.subr.bf16.mxu0 0
      %612 = vmatpush1.bf16.msra.mxu0 0
      %613 = vmatprep.subr.bf16.mxu0 0
      %614 = vmatpush1.bf16.msra.mxu0 0
      %615 = vmatprep.subr.bf16.mxu0 0
      %616 = vmatpush1.bf16.msra.mxu0 0
      %617 = vmatprep.subr.bf16.mxu0 0
      %618 = vmatpush1.bf16.msra.mxu0 0
      %619 = vmatprep.subr.bf16.mxu0 0
      %620 = vmatpush1.bf16.msra.mxu0 0
      %621 = vmatprep.mubr.bf16.mxu0 0
      %622 = vmatmul.mubr.bf16.gmra.mrb[0].mxu0 %v587
      %v623 = vpop.f32.mrb[0].mxu0
      %v624 = vadd.f32 %v571, %v623
      %v625 = vpop.f32.mrb[0].mxu0
      %v626 = vpop.f32.mrb[0].mxu0
      %v627 = vadd.f32 %v572, %v626
      %v628 = vpop.f32.mrb[0].mxu0
      %629 = vdwg.mxu0
      %s630 = scalar_lea.vmem %s256, 48
      %631 = vst.msk [vmem:[%s630] sm:$0xff] %vm459, %v624
      %632 = vst.msk [vmem:[%s630 + $0x8] sm:$0xff] %vm459, %v627
      %v633 = vld [vmem:[%s565 + $0x8] sm:$0xf]
      %v634 = vld [vmem:[%s565 + $0xc] sm:$0xf]
      %v635 = vunpack.c.l.bf16 %v633
      %v636 = vunpack.c.l.bf16 %v634
      %v637 = vmul.f32 %v570, %v635
      %v638 = vmul.f32 %v570, %v636
      %641 = vrot.lane.b32.xlu0 %v395, 112
      %v642 = vpop.permute.xlu0 %641
      %643 = vrot.lane.b32.xlu0 %v396, 112
      %v644 = vpop.permute.xlu0 %643
      %647 = vmatprep.subr.bf16.mxu0 0
      %648 = vmatpush1.bf16.msra.mxu0 %v642
      %649 = vmatprep.subr.bf16.mxu0 0
      %650 = vmatpush1.bf16.msra.mxu0 %v644
      %651 = vmatprep.subr.bf16.mxu0 0
      %652 = vmatpush1.bf16.msra.mxu0 0
      %653 = vmatprep.subr.bf16.mxu0 0
      %654 = vmatpush1.bf16.msra.mxu0 0
      %655 = vmatprep.subr.bf16.mxu0 0
      %656 = vmatpush1.bf16.msra.mxu0 0
      %657 = vmatprep.subr.bf16.mxu0 0
      %658 = vmatpush1.bf16.msra.mxu0 0
      %659 = vmatprep.subr.bf16.mxu0 0
      %660 = vmatpush1.bf16.msra.mxu0 0
      %661 = vmatprep.subr.bf16.mxu0 0
      %662 = vmatpush1.bf16.msra.mxu0 0
      %663 = vmatprep.subr.bf16.mxu0 0
      %664 = vmatpush1.bf16.msra.mxu0 0
      %665 = vmatprep.subr.bf16.mxu0 0
      %666 = vmatpush1.bf16.msra.mxu0 0
      %667 = vmatprep.subr.bf16.mxu0 0
      %668 = vmatpush1.bf16.msra.mxu0 0
      %669 = vmatprep.subr.bf16.mxu0 0
      %670 = vmatpush1.bf16.msra.mxu0 0
      %671 = vmatprep.subr.bf16.mxu0 0
      %672 = vmatpush1.bf16.msra.mxu0 0
      %673 = vmatprep.subr.bf16.mxu0 0
      %674 = vmatpush1.bf16.msra.mxu0 0
      %675 = vmatprep.subr.bf16.mxu0 0
      %676 = vmatpush1.bf16.msra.mxu0 0
      %677 = vmatprep.subr.bf16.mxu0 0
      %678 = vmatpush1.bf16.msra.mxu0 0
      %679 = vmatprep.mubr.bf16.mxu0 0
      %680 = vmatmul.mubr.bf16.gmra.mrb[0].mxu0 %v587
      %v681 = vpop.f32.mrb[0].mxu0
      %v682 = vadd.f32 %v637, %v681
      %v683 = vpop.f32.mrb[0].mxu0
      %v684 = vpop.f32.mrb[0].mxu0
      %v685 = vadd.f32 %v638, %v684
      %v686 = vpop.f32.mrb[0].mxu0
      %687 = vdwg.mxu0
      %688 = vst.msk [vmem:[%s630 + $0x10] sm:$0xff] %vm459, %v682
      %689 = vst.msk [vmem:[%s630 + $0x18] sm:$0xff] %vm459, %v685
      %v690 = vld [vmem:[%s565 + $0x10] sm:$0xf]
      %v691 = vld [vmem:[%s565 + $0x14] sm:$0xf]
      %v692 = vunpack.c.l.bf16 %v690
      %v693 = vunpack.c.l.bf16 %v691
      %v694 = vmul.f32 %v570, %v692
      %v695 = vmul.f32 %v570, %v693
      %698 = vrot.lane.b32.xlu0 %v397, 112
      %v699 = vpop.permute.xlu0 %698
      %700 = vrot.lane.b32.xlu0 %v398, 112
      %v701 = vpop.permute.xlu0 %700
      %704 = vmatprep.subr.bf16.mxu0 0
      %705 = vmatpush1.bf16.msra.mxu0 %v699
      %706 = vmatprep.subr.bf16.mxu0 0
      %707 = vmatpush1.bf16.msra.mxu0 %v701
      %708 = vmatprep.subr.bf16.mxu0 0
      %709 = vmatpush1.bf16.msra.mxu0 0
      %710 = vmatprep.subr.bf16.mxu0 0
      %711 = vmatpush1.bf16.msra.mxu0 0
      %712 = vmatprep.subr.bf16.mxu0 0
      %713 = vmatpush1.bf16.msra.mxu0 0
      %714 = vmatprep.subr.bf16.mxu0 0
      %715 = vmatpush1.bf16.msra.mxu0 0
      %716 = vmatprep.subr.bf16.mxu0 0
      %717 = vmatpush1.bf16.msra.mxu0 0
      %718 = vmatprep.subr.bf16.mxu0 0
      %719 = vmatpush1.bf16.msra.mxu0 0
      %720 = vmatprep.subr.bf16.mxu0 0
      %721 = vmatpush1.bf16.msra.mxu0 0
      %722 = vmatprep.subr.bf16.mxu0 0
      %723 = vmatpush1.bf16.msra.mxu0 0
      %724 = vmatprep.subr.bf16.mxu0 0
      %725 = vmatpush1.bf16.msra.mxu0 0
      %726 = vmatprep.subr.bf16.mxu0 0
      %727 = vmatpush1.bf16.msra.mxu0 0
      %728 = vmatprep.subr.bf16.mxu0 0
      %729 = vmatpush1.bf16.msra.mxu0 0
      %730 = vmatprep.subr.bf16.mxu0 0
      %731 = vmatpush1.bf16.msra.mxu0 0
      %732 = vmatprep.subr.bf16.mxu0 0
      %733 = vmatpush1.bf16.msra.mxu0 0
      %734 = vmatprep.subr.bf16.mxu0 0
      %735 = vmatpush1.bf16.msra.mxu0 0
      %736 = vmatprep.mubr.bf16.mxu0 0
      %737 = vmatmul.mubr.bf16.gmra.mrb[0].mxu0 %v587
      %v738 = vpop.f32.mrb[0].mxu0
      %v739 = vadd.f32 %v694, %v738
      %v740 = vpop.f32.mrb[0].mxu0
      %v741 = vpop.f32.mrb[0].mxu0
      %v742 = vadd.f32 %v695, %v741
      %v743 = vpop.f32.mrb[0].mxu0
      %744 = vdwg.mxu0
      %745 = vst.msk [vmem:[%s630 + $0x20] sm:$0xff] %vm459, %v739
      %746 = vst.msk [vmem:[%s630 + $0x28] sm:$0xff] %vm459, %v742
      %s747 = smul.u32 2, %s22
      %p748 = scmp.lt.s32.totalorder %s747, 3
      %s749 = scalar_select %p748, %s747, 3
      %s750 = smul.addr %s749, 6
      %s751 = smul.addr %s750, 8
      %s752 = scalar_lea.vmem %s5, %s751
      // Predicated region
      $region37: #{tpu_custom_call.1} parent=35 // pred_check
        %p753 = pneg %p139
      $region38: #{tpu_custom_call.1} parent=35 // pred_check_branch
        %755 = sbr.rel (%p753) target = $region40
      $region39: #{tpu_custom_call.1} parent=35 // pred_region
        %s756 = smul.u32 2, %s22
      $region40: #{tpu_custom_call.1} parent=35 // pred_fallthru
        _
    $region36: #{tpu_custom_call.1} parent=5 // pred_fallthru
      _
    %p757 = scmp.le.s32.totalorder 2, %s17
    // Predicated region
    $region41: #{tpu_custom_call.1} parent=5 // pred_check
      %p758 = pneg %p757
    $region42: #{tpu_custom_call.1} parent=5 // pred_check_branch
      %760 = sbr.rel (%p758) target = $region44
    $region43: #{tpu_custom_call.1} parent=5 // pred_region
      %s761 = ssub.s32 %s17, 2
      // Predicated region
      $region45: #{tpu_custom_call.1} parent=43 // pred_check
        %p762 = pneg %p145
      $region46: #{tpu_custom_call.1} parent=43 // pred_check_branch
        %764 = sbr.rel (%p762) target = $region48
      $region47: #{tpu_custom_call.1} parent=43 // pred_region
        %s765 = smul.u32 2, %s23
        %p766 = scmp.lt.s32.totalorder %s765, 3
        %s767 = scalar_select %p766, %s765, 3
        %s768 = smul.addr %s767, 6
        %s769 = smul.addr %s768, 8
        %s770 = scalar_lea.vmem %s5, %s769
      $region48: #{tpu_custom_call.1} parent=43 // pred_fallthru
        _
    $region44: #{tpu_custom_call.1} parent=5 // pred_fallthru
      _
  $region6: #{tpu_custom_call.1} parent=0 // loop_footer
    %s21 = sadd.s32 1, %s17
  $region7: #{tpu_custom_call.1} parent=0 // loop_footer_branch
    %16 = sbr.rel target = $region3
  $region8: #{tpu_custom_call.1} parent=0 // loop_exit
    _

</llo_original>
